<compile_context>
chip_gen: v5e
topology: v5e:2x2
jax: 0.10.0
libtpu: 0.0.40
codegen_flags: <defaults>
</compile_context>

<pallas_src>
import jax
import jax.numpy as jnp
from jax.experimental import pallas as pl
from jax.experimental.pallas import tpu as pltpu


def _interp_matrix(in_size: int, out_size: int) -> jnp.ndarray:
    """Bilinear (align_corners=True) 1-D interpolation matrix of shape (out_size, in_size)."""
    if out_size == 1 or in_size == 1:
        m = jnp.zeros((out_size, in_size), jnp.float32)
        return m.at[:, 0].set(1.0)
    idx = jnp.arange(out_size, dtype=jnp.float32)
    src = idx * (in_size - 1) / (out_size - 1)
    lo = jnp.clip(jnp.floor(src).astype(jnp.int32), 0, in_size - 1)
    hi = jnp.clip(lo + 1, 0, in_size - 1)
    frac = src - lo.astype(jnp.float32)
    rows = jnp.arange(out_size)
    m = jnp.zeros((out_size, in_size), jnp.float32)
    m = m.at[rows, lo].add(1.0 - frac)
    m = m.at[rows, hi].add(frac)
    return m


def _interp_kernel(x_ref, w_ref, o_ref):
    # x_ref: (Bb, H*W)    lane-dense block of flattened low-res images
    # w_ref: (H*W, Nb)    resident column-slab of the fused interpolation weight
    # o_ref: (Bb, Nb)     lane-dense slab of flattened upsampled images
    o_ref[...] = jnp.dot(x_ref[...], w_ref[...],
                         preferred_element_type=jnp.float32).astype(o_ref.dtype)


def _default_block_rows() -> int:
    """Generation-aware batch-block (matmul M) target: keep per-step blocks multi-MiB on
    v5e/v6e (128 MiB VMEM) while staying lean on v7x (64 MiB VMEM per TensorCore)."""
    try:
        vmem = pltpu.get_tpu_info().vmem_capacity_bytes
    except Exception:
        vmem = 64 << 20
    return 512 if vmem >= (96 << 20) else 256


def _choose_block_b(B: int, target: int):
    """Return (Bb, Bpad) with Bb | Bpad exactly (no partial-block writes)."""
    if B <= target:
        return B, B                       # single block == full dim, always legal
    t8 = max(8, target - (target % 8))
    for bb in range(t8, 7, -8):           # prefer a multiple-of-8 divisor of B
        if B % bb == 0:
            return bb, B
    bpad = ((B + t8 - 1) // t8) * t8      # rare fallback: zero-pad the batch
    return t8, bpad


def _choose_block_n(n_out: int, target: int = 2048) -> int:
    """Output-column slab width: multiple of 128 (lane-dense) that divides n_out."""
    if n_out <= target:
        return n_out
    start = max(128, target - (target % 128))
    for nb in range(start, 127, -128):
        if n_out % nb == 0:
            return nb
    return n_out


def interpolation_forward(x: jnp.ndarray, scale: int = 4, mode: str = "bilinear",
                          block_b: int | None = None,
                          block_n: int | None = None) -> jnp.ndarray:
    """Pallas TPU equivalent of Interpolation.forward (bilinear, align_corners=True) for NCHW."""
    assert mode == "bilinear", "only bilinear mode implemented"
    N, C, H, W = x.shape
    H_out, W_out = H * scale, W * scale
    B = N * C
    K = H * W
    n_out = H_out * W_out

    # Fused separable weight: Wcomb[h*W + w, o*W_out + p] = Wy[o,h] * Wx[p,w]   (f32, exact math)
    wy = _interp_matrix(H, H_out)                       # (H_out, H)
    wx = _interp_matrix(W, W_out)                       # (W_out, W)
    wcomb = jnp.einsum("oh,pw->hwop", wy, wx).reshape(K, n_out)

    x2d = x.reshape(B, K)                               # free reshape, lane-dense (K >= 128 here)

    target_b = block_b if block_b is not None else _default_block_rows()
    bb, bpad = _choose_block_b(B, target_b)
    nb = block_n if block_n is not None else _choose_block_n(n_out)
    n_blocks = n_out // nb
    # v7x has 2 TensorCores: make sure the parallel grid has >= 2 steps when possible.
    if (bpad // bb) * n_blocks < 2 and bb % 16 == 0:
        bb //= 2
    b_blocks = bpad // bb

    if bpad > B:
        x2d = jnp.pad(x2d, ((0, bpad - B), (0, 0)))

    # Column-slab axis OUTER, batch axis INNER: the weight slab's block index is constant
    # over the inner batch sweep, so it stays VMEM-resident (no per-step weight refetch).
    grid = (n_blocks, b_blocks)

    flops = 2 * bpad * K * n_out
    bytes_accessed = 4 * (bpad * K + K * n_out + bpad * n_out)

    out2d = pl.pallas_call(
        _interp_kernel,
        out_shape=jax.ShapeDtypeStruct((bpad, n_out), x.dtype),
        grid_spec=pltpu.PrefetchScalarGridSpec(
            num_scalar_prefetch=0,
            grid=grid,
            in_specs=[
                pl.BlockSpec((bb, K), lambda j, i: (i, 0)),   # batch block of flattened images
                pl.BlockSpec((K, nb), lambda j, i: (0, j)),   # resident weight column-slab
            ],
            out_specs=pl.BlockSpec((bb, nb), lambda j, i: (i, j)),
        ),
        compiler_params=pltpu.CompilerParams(
            dimension_semantics=("parallel", "parallel"),
            vmem_limit_bytes=40 * 1024 * 1024,   # ~2x headroom over worst-case blocks; < v7x physical
        ),
        cost_estimate=pl.CostEstimate(flops=flops, transcendentals=0,
                                      bytes_accessed=bytes_accessed),
    )(x2d, wcomb)

    if bpad > B:
        out2d = out2d[:B]
    # (B, H_out*W_out) is row-major in (b, o, p) -> free reshape back to NCHW.
    return out2d.reshape(N, C, H_out, W_out)


if __name__ == "__main__":
    key = jax.random.PRNGKey(0)
    N, C, H, W = 2, 4, 16, 16
    scale = 4
    x = jax.random.normal(key, (N, C, H, W), dtype=jnp.float32)

    y = interpolation_forward(x, scale=scale, mode="bilinear")
    jax.block_until_ready(y)

    # sanity check against a pure-JAX separable reference (same align_corners math)
    wy = _interp_matrix(H, H * scale)
    wx = _interp_matrix(W, W * scale)
    y_ref = jnp.einsum("oh,nchw,pw->ncop", wy, x, wx)
    assert y.shape == (N, C, H * scale, W * scale)
    assert jnp.allclose(y, y_ref, atol=1e-5, rtol=1e-5)

    print("KERNEL_OK")
</pallas_src>

<mosaic_0001>
module attributes {stable_mosaic.version = 11 : i64} {
  func.func @_interp_kernel(%arg0: i32, %arg1: i32, %arg2: memref<8x256xf32, #tpu.memory_space<vmem>>, %arg3: memref<256x2048xf32, #tpu.memory_space<vmem>>, %arg4: memref<8x2048xf32, #tpu.memory_space<vmem>>) attributes {dimension_semantics = [#tpu.dimension_semantics<parallel>, #tpu.dimension_semantics<parallel>], iteration_bounds = array<i64: 2, 1>, scalar_prefetch = 0 : i64, scratch_operands = 0 : i64, tpu.core_type = #tpu.core_type<tc>, window_params = [{transform_indices = @transform_0, window_bounds = array<i64: 8, 256>}, {transform_indices = @transform_1, window_bounds = array<i64: 256, 2048>}, {transform_indices = @transform_2, window_bounds = array<i64: 8, 2048>}]} {
    %c0 = arith.constant 0 : index
    %c0_0 = arith.constant 0 : index
    %0 = vector.load %arg2[%c0, %c0_0] : memref<8x256xf32, #tpu.memory_space<vmem>>, vector<8x256xf32>
    %c0_1 = arith.constant 0 : index
    %c0_2 = arith.constant 0 : index
    %1 = vector.load %arg3[%c0_1, %c0_2] : memref<256x2048xf32, #tpu.memory_space<vmem>>, vector<256x2048xf32>
    %cst = arith.constant dense<0.000000e+00> : vector<8x2048xf32>
    %2 = tpu.matmul %0, %1, %cst {dimension_numbers = #tpu.dot_dimension_numbers<[1], [0], [0], [1], [0, 0, 1, 1], [], []>} : vector<8x256xf32>, vector<256x2048xf32>, vector<8x2048xf32> -> vector<8x2048xf32>
    %c0_3 = arith.constant 0 : index
    %c0_4 = arith.constant 0 : index
    %3 = vector.load %arg4[%c0_3, %c0_4] : memref<8x2048xf32, #tpu.memory_space<vmem>>, vector<8x2048xf32>
    tpu.vector_store %arg4[%c0_3, %c0_4], %2 {strides = array<i32>} : memref<8x2048xf32, #tpu.memory_space<vmem>>, vector<8x2048xf32>,
    return
  }
  func.func @transform_0(%arg0: i32, %arg1: i32) -> (i32, i32) {
    %c0_i32 = arith.constant 0 : i32
    %c0_i32_0 = arith.constant 0 : i32
    return %arg1, %c0_i32 : i32, i32
  }
  func.func @transform_1(%arg0: i32, %arg1: i32) -> (i32, i32) {
    %c0_i32 = arith.constant 0 : i32
    %c0_i32_0 = arith.constant 0 : i32
    return %c0_i32, %arg0 : i32, i32
  }
  func.func @transform_2(%arg0: i32, %arg1: i32) -> (i32, i32) {
    %c0_i32 = arith.constant 0 : i32
    return %arg1, %arg0 : i32, i32
  }
}

</mosaic_0001>

<llo_original>
// kernel: tpu_custom_call.1
$region0: #{tpu_custom_call.1}
  #allocation0 [shape = 'u32[]', space=smem, size = 0x4, offset = 0x4, fixed_abs, tag = 'smem constant byte address 0x4 - core index']
  #allocation1 [shape = 'u32[72,128]{1,0:T(1,128)}', space=vmem, size = 0x9000, scoped, tag = 'internal scratch']
  %s0 = inlined_call_operand.hbm [shape: f32[8,256], index: 0, kind: input, shape index: {}]
  %s1 = inlined_call_operand.hbm [shape: f32[256,4096], index: 1, kind: input, shape index: {}]
  %s2 = inlined_call_operand.hbm [shape: f32[8,4096], index: 2, kind: output, shape index: {}]
  %s3 = sld [smem:[#allocation0]]
  $region49: #{tpu_custom_call.1} parent=0
    _
  %s5 = ssub.s32 1, %s3
  %s6 = scalar_select 0, %s5, %s3
  $region1: #{tpu_custom_call.1} parent=0
    #allocation2 [shape = 'u8[8192]{0}', space=vmem, size = 0x2000, scoped, tag = 'input window, operand 0, single buffered']
    #allocation3 [shape = 's32[2]{0}', space=sflag, size = 0x8, scoped, tag = 'scoped memory for tpu_custom_call.1']
    #allocation4 [shape = 's32[2]{0}', space=sflag, size = 0x8, scoped, tag = 'scoped memory for tpu_custom_call.1']
    #allocation5 [shape = 'u8[4194304]{0}', space=vmem, size = 0x400000, scoped, tag = 'input window, operand 1']
    #allocation6 [shape = 's32[2]{0}', space=sflag, size = 0x8, scoped, tag = 'scoped memory for tpu_custom_call.1']
    #allocation7 [shape = 'u8[131072]{0}', space=vmem, size = 0x20000, scoped, tag = 'output window, operand 0']
    %7 = vsyncpa [#allocation3], 0
    %8 = vsyncpa [#allocation6], 0
    %s9 = scalar_lea.sflag [#allocation6], 1
    %10 = vsyncpa %s9, 0
    %11 = vsyncpa [#allocation4], 0
    %s12 = scalar_lea.sflag [#allocation4], 1
    %13 = vsyncpa %s12, 0
    loop: start=0, step=1, limit=4
    $region2: #{tpu_custom_call.1} parent=1 // loop_pre_header
      _
    $region3: #{tpu_custom_call.1} parent=1 // loop_header
      %s15 = sphi 0, %s19
      %p16 = scmp.ge.s32.totalorder %s15, 4
      %s22 = sphi 0, %s34
      %s23 = sphi 0, %s30
      %s24 = sphi 0, %s22
      %s25 = sphi 0, %s23
      %s26 = sphi 0, %s24
      %s27 = sphi 0, %s25
      %s37 = sphi 0, %s39
      %s40 = sphi 0, %s37
      %s41 = sphi 0, %s40
      %s57 = sphi 0, %s41
      %s63 = sphi 0, %s65
      %s66 = sphi 0, %s63
      %s67 = sphi 0, %s66
      %s83 = sphi 0, %s67
      %s91 = sphi 0, %s93
      %s94 = sphi 0, %s91
      %s95 = sphi 0, %s94
      %s111 = sphi 0, %s95
    $region4: #{tpu_custom_call.1} parent=1 // loop_header_branch
      %18 = sbr.rel (%p16) target = $region8
    $region5: #{tpu_custom_call.1} parent=1 // loop_body
      %s20 = ssub.s32 %s15, 1
      %s21 = ssub.s32 %s15, 2
      %s28 = sadd.s32 1, %s23
      %p29 = scmp.ge.s32.totalorder %s28, 1
      %s30 = scalar_select %p29, 0, %s28
      %s31 = sadd.s32 1, %s22
      %s32 = scalar_select %p29, %s31, %s22
      %p33 = scmp.ge.s32.totalorder %s32, 2
      %s34 = scalar_select %p33, 0, %s32
      %s35 = ssub.s32 %s23, %s30
      %p36 = scmp.eq.s32.totalorder %s35, 0
      %s38 = sadd.s32 %s37, 1
      %s39 = scalar_select %p36, %s37, %s38
      %p42 = pneg %p36
      %p43 = scmp.eq.s32.totalorder %s15, 1
      %p44 = por %p42, %p43
      %p45 = scmp.ne.s32.totalorder %s37, %s40
      %p46 = scmp.eq.s32.totalorder %s15, 0
      %p47 = por %p45, %p46
      %p48 = scmp.ne.s32.totalorder %s37, %s40
      %p49 = scmp.eq.s32.totalorder %s20, 1
      %p50 = por %p48, %p49
      %p51 = scmp.ne.s32.totalorder %s40, %s41
      %p52 = scmp.eq.s32.totalorder %s20, 0
      %p53 = por %p51, %p52
      %p54 = scmp.ne.s32.totalorder %s40, %s41
      %p55 = scmp.eq.s32.totalorder %s21, 1
      %p56 = por %p54, %p55
      %p58 = scmp.ne.s32.totalorder %s41, %s57
      %p59 = scmp.eq.s32.totalorder %s21, 0
      %p60 = por %p58, %p59
      %s61 = ssub.s32 %s22, %s34
      %p62 = scmp.eq.s32.totalorder %s61, 0
      %s64 = sadd.s32 %s63, 1
      %s65 = scalar_select %p62, %s63, %s64
      %p68 = pneg %p62
      %p69 = scmp.eq.s32.totalorder %s15, 1
      %p70 = por %p68, %p69
      %p71 = scmp.ne.s32.totalorder %s63, %s66
      %p72 = scmp.eq.s32.totalorder %s15, 0
      %p73 = por %p71, %p72
      %p74 = scmp.ne.s32.totalorder %s63, %s66
      %p75 = scmp.eq.s32.totalorder %s20, 1
      %p76 = por %p74, %p75
      %p77 = scmp.ne.s32.totalorder %s66, %s67
      %p78 = scmp.eq.s32.totalorder %s20, 0
      %p79 = por %p77, %p78
      %p80 = scmp.ne.s32.totalorder %s66, %s67
      %p81 = scmp.eq.s32.totalorder %s21, 1
      %p82 = por %p80, %p81
      %p84 = scmp.ne.s32.totalorder %s67, %s83
      %p85 = scmp.eq.s32.totalorder %s21, 0
      %p86 = por %p84, %p85
      %s87 = ssub.s32 %s23, %s30
      %s88 = ssub.s32 %s22, %s34
      %s89 = sor.u32 %s87, %s88
      %p90 = scmp.eq.s32.totalorder %s89, 0
      %s92 = sadd.s32 %s91, 1
      %s93 = scalar_select %p90, %s91, %s92
      %p96 = pneg %p90
      %p97 = scmp.eq.s32.totalorder %s15, 1
      %p98 = por %p96, %p97
      %p99 = scmp.ne.s32.totalorder %s91, %s94
      %p100 = scmp.eq.s32.totalorder %s15, 0
      %p101 = por %p99, %p100
      %p102 = scmp.ne.s32.totalorder %s91, %s94
      %p103 = scmp.eq.s32.totalorder %s20, 1
      %p104 = por %p102, %p103
      %p105 = scmp.ne.s32.totalorder %s94, %s95
      %p106 = scmp.eq.s32.totalorder %s20, 0
      %p107 = por %p105, %p106
      %p108 = scmp.ne.s32.totalorder %s94, %s95
      %p109 = scmp.eq.s32.totalorder %s21, 1
      %p110 = por %p108, %p109
      %p112 = scmp.ne.s32.totalorder %s95, %s111
      %p113 = scmp.eq.s32.totalorder %s21, 0
      %p114 = por %p112, %p113
      %p115 = scmp.le.s32.totalorder 1, %s15
      %p116 = scmp.lt.s32.totalorder %s15, 3
      %p117 = pnand %p115, %p116
      %p118 = pneg %p117
      // Predicated region
      $region9: #{tpu_custom_call.1} parent=5 // pred_check
        _
      $region10: #{tpu_custom_call.1} parent=5 // pred_check_branch
        %120 = sbr.rel (%p117) target = $region12
      $region11: #{tpu_custom_call.1} parent=5 // pred_region
        %s121 = ssub.s32 %s15, 1
        // Predicated region
        $region13: #{tpu_custom_call.1} parent=11 // pred_check
          %p122 = pneg %p53
        $region14: #{tpu_custom_call.1} parent=11 // pred_check_branch
          %124 = sbr.rel (%p122) target = $region16
        $region15: #{tpu_custom_call.1} parent=11 // pred_region
          %126 = vsyncadd [#allocation3], 0
          %s127 = smul.addr %s25, 2
          %s128 = smul.addr %s127, 8
          %s129 = scalar_lea.hbm %s0, %s128
          %s131 = sshll.u32 %s129, 4
          %s132 = int_to_ptr.hbm [resolvable:$true] %s131
          %s133 = sshll.u32 [#allocation2], 4
          %s134 = int_to_ptr.vmem [resolvable:$true] %s133
          %136 = dma.hbm_to_vmem [thread:$0]  %s132, 256, %s134, [#allocation3]
        $region16: #{tpu_custom_call.1} parent=11 // pred_fallthru
          _
      $region12: #{tpu_custom_call.1} parent=5 // pred_fallthru
        _
      %p137 = scmp.lt.s32.totalorder %s15, 2
      // Predicated region
      $region17: #{tpu_custom_call.1} parent=5 // pred_check
        %p138 = pneg %p137
      $region18: #{tpu_custom_call.1} parent=5 // pred_check_branch
        %140 = sbr.rel (%p138) target = $region20
      $region19: #{tpu_custom_call.1} parent=5 // pred_region
        // Predicated region
        $region21: #{tpu_custom_call.1} parent=19 // pred_check
          %p141 = pneg %p73
        $region22: #{tpu_custom_call.1} parent=19 // pred_check_branch
          %143 = sbr.rel (%p141) target = $region24
        $region23: #{tpu_custom_call.1} parent=19 // pred_region
          %s144 = sand.u32 %s63, 1
          %s145 = scalar_lea.sflag [#allocation6], %s144
          %s146 = sand.u32 %s63, 1
          %s147 = smul.addr %s146, 4096
          %s148 = scalar_lea.vmem [#allocation5], %s147
          %s149 = smul.u32 16, %s22
          %151 = vsyncadd %s145, 0
          %s152 = smul.addr %s149, 8
          %s153 = scalar_lea.hbm %s1, %s152
          %s154 = sshll.u32 %s153, 4
          %s155 = int_to_ptr.hbm [resolvable:$true] %s154
          %s156 = sshll.u32 %s148, 4
          %s157 = int_to_ptr.vmem [resolvable:$true] %s156
          %162 = dma.hbm_to_vmem [thread:$0]  %s155, 65536, %s157, %s145, 4096, 2048, 128
        $region24: #{tpu_custom_call.1} parent=19 // pred_fallthru
          _
      $region20: #{tpu_custom_call.1} parent=5 // pred_fallthru
        _
      %p163 = scmp.le.s32.totalorder 1, %s15
      %p164 = scmp.lt.s32.totalorder %s15, 3
      %p165 = pnand %p163, %p164
      %p166 = pneg %p165
      // Predicated region
      $region25: #{tpu_custom_call.1} parent=5 // pred_check
        _
      $region26: #{tpu_custom_call.1} parent=5 // pred_check_branch
        %168 = sbr.rel (%p165) target = $region28
      $region27: #{tpu_custom_call.1} parent=5 // pred_region
        %s169 = ssub.s32 %s15, 1
        // Predicated region
        $region29: #{tpu_custom_call.1} parent=27 // pred_check
          %p170 = pneg %p53
        $region30: #{tpu_custom_call.1} parent=27 // pred_check_branch
          %172 = sbr.rel (%p170) target = $region32
        $region31: #{tpu_custom_call.1} parent=27 // pred_region
          %174 = dma.done [#allocation3], 256
        $region32: #{tpu_custom_call.1} parent=27 // pred_fallthru
          _
        %s175 = sand.u32 %s66, 1
        %s176 = scalar_lea.sflag [#allocation6], %s175
        %s177 = sand.u32 %s66, 1
        %s178 = smul.addr %s177, 4096
        %s179 = scalar_lea.vmem [#allocation5], %s178
        // Predicated region
        $region33: #{tpu_custom_call.1} parent=27 // pred_check
          %p180 = pneg %p79
        $region34: #{tpu_custom_call.1} parent=27 // pred_check_branch
          %182 = sbr.rel (%p180) target = $region36
        $region35: #{tpu_custom_call.1} parent=27 // pred_region
          %184 = dma.done %s176, 65536
        $region36: #{tpu_custom_call.1} parent=27 // pred_fallthru
          _
        %p185 = pneg %p53
        %p186 = pneg %p50
        %s187 = sand.u32 %s66, 1
        %s188 = scalar_lea.sflag [#allocation6], %s187
        %s189 = sand.u32 %s66, 1
        %s190 = smul.addr %s189, 4096
        %s191 = scalar_lea.vmem [#allocation5], %s190
        %p192 = pneg %p79
        %p193 = pneg %p76
        %p194 = pneg %p107
        %p195 = pneg %p104
        %s196 = sand.u32 %s94, 1
        %s197 = scalar_lea.sflag [#allocation4], %s196
        %s198 = sand.u32 %s94, 1
        %s199 = smul.addr %s198, 128
        %s200 = scalar_lea.vmem [#allocation7], %s199
        %s201 = smul.u32 16, %s24
        %s202 = smul.u32 16, %s24
        %v203 = vld [vmem:[#allocation2] sm:$0xff]
        %v204 = vld [vmem:[#allocation2 + $0x8] sm:$0xff]
        %v205 = vld [vmem:[%s179] sm:$0xff]
        %v206 = vld [vmem:[%s179 + $0x8] sm:$0xff]
        %v207 = vld [vmem:[%s179 + $0x10] sm:$0xff]
        %v208 = vld [vmem:[%s179 + $0x18] sm:$0xff]
        %v209 = vld [vmem:[%s179 + $0x20] sm:$0xff]
        %v210 = vld [vmem:[%s179 + $0x28] sm:$0xff]
        %v211 = vld [vmem:[%s179 + $0x30] sm:$0xff]
        %v212 = vld [vmem:[%s179 + $0x38] sm:$0xff]
        %v213 = vld [vmem:[%s179 + $0x40] sm:$0xff]
        %v214 = vld [vmem:[%s179 + $0x48] sm:$0xff]
        %v215 = vld [vmem:[%s179 + $0x50] sm:$0xff]
        %v216 = vld [vmem:[%s179 + $0x58] sm:$0xff]
        %v217 = vld [vmem:[%s179 + $0x60] sm:$0xff]
        %v218 = vld [vmem:[%s179 + $0x68] sm:$0xff]
        %v219 = vld [vmem:[%s179 + $0x70] sm:$0xff]
        %v220 = vld [vmem:[%s179 + $0x78] sm:$0xff]
        %v221 = vld [vmem:[%s179 + $0x80] sm:$0xff]
        %v222 = vld [vmem:[%s179 + $0x88] sm:$0xff]
        %v223 = vld [vmem:[%s179 + $0x90] sm:$0xff]
        %v224 = vld [vmem:[%s179 + $0x98] sm:$0xff]
        %v225 = vld [vmem:[%s179 + $0xa0] sm:$0xff]
        %v226 = vld [vmem:[%s179 + $0xa8] sm:$0xff]
        %v227 = vld [vmem:[%s179 + $0xb0] sm:$0xff]
        %v228 = vld [vmem:[%s179 + $0xb8] sm:$0xff]
        %v229 = vld [vmem:[%s179 + $0xc0] sm:$0xff]
        %v230 = vld [vmem:[%s179 + $0xc8] sm:$0xff]
        %v231 = vld [vmem:[%s179 + $0xd0] sm:$0xff]
        %v232 = vld [vmem:[%s179 + $0xd8] sm:$0xff]
        %v233 = vld [vmem:[%s179 + $0xe0] sm:$0xff]
        %v234 = vld [vmem:[%s179 + $0xe8] sm:$0xff]
        %v235 = vld [vmem:[%s179 + $0xf0] sm:$0xff]
        %v236 = vld [vmem:[%s179 + $0xf8] sm:$0xff]
        %v237 = vld [vmem:[%s179 + $0x100] sm:$0xff]
        %v238 = vld [vmem:[%s179 + $0x108] sm:$0xff]
        %v239 = vld [vmem:[%s179 + $0x110] sm:$0xff]
        %v240 = vld [vmem:[%s179 + $0x118] sm:$0xff]
        %v241 = vld [vmem:[%s179 + $0x120] sm:$0xff]
        %v242 = vld [vmem:[%s179 + $0x128] sm:$0xff]
        %v243 = vld [vmem:[%s179 + $0x130] sm:$0xff]
        %v244 = vld [vmem:[%s179 + $0x138] sm:$0xff]
        %v245 = vld [vmem:[%s179 + $0x140] sm:$0xff]
        %v246 = vld [vmem:[%s179 + $0x148] sm:$0xff]
        %v247 = vld [vmem:[%s179 + $0x150] sm:$0xff]
        %v248 = vld [vmem:[%s179 + $0x158] sm:$0xff]
        %v249 = vld [vmem:[%s179 + $0x160] sm:$0xff]
        %v250 = vld [vmem:[%s179 + $0x168] sm:$0xff]
        %v251 = vld [vmem:[%s179 + $0x170] sm:$0xff]
        %v252 = vld [vmem:[%s179 + $0x178] sm:$0xff]
        %v253 = vld [vmem:[%s179 + $0x180] sm:$0xff]
        %v254 = vld [vmem:[%s179 + $0x188] sm:$0xff]
        %v255 = vld [vmem:[%s179 + $0x190] sm:$0xff]
        %v256 = vld [vmem:[%s179 + $0x198] sm:$0xff]
        %v257 = vld [vmem:[%s179 + $0x1a0] sm:$0xff]
        %v258 = vld [vmem:[%s179 + $0x1a8] sm:$0xff]
        %v259 = vld [vmem:[%s179 + $0x1b0] sm:$0xff]
        %v260 = vld [vmem:[%s179 + $0x1b8] sm:$0xff]
        %v261 = vld [vmem:[%s179 + $0x1c0] sm:$0xff]
        %v262 = vld [vmem:[%s179 + $0x1c8] sm:$0xff]
        %v263 = vld [vmem:[%s179 + $0x1d0] sm:$0xff]
        %v264 = vld [vmem:[%s179 + $0x1d8] sm:$0xff]
        %v265 = vld [vmem:[%s179 + $0x1e0] sm:$0xff]
        %v266 = vld [vmem:[%s179 + $0x1e8] sm:$0xff]
        %v267 = vld [vmem:[%s179 + $0x1f0] sm:$0xff]
        %v268 = vld [vmem:[%s179 + $0x1f8] sm:$0xff]
        %v269 = vld [vmem:[%s179 + $0x200] sm:$0xff]
        %v270 = vld [vmem:[%s179 + $0x208] sm:$0xff]
        %v271 = vld [vmem:[%s179 + $0x210] sm:$0xff]
        %v272 = vld [vmem:[%s179 + $0x218] sm:$0xff]
        %v273 = vld [vmem:[%s179 + $0x220] sm:$0xff]
        %v274 = vld [vmem:[%s179 + $0x228] sm:$0xff]
        %v275 = vld [vmem:[%s179 + $0x230] sm:$0xff]
        %v276 = vld [vmem:[%s179 + $0x238] sm:$0xff]
        %v277 = vld [vmem:[%s179 + $0x240] sm:$0xff]
        %v278 = vld [vmem:[%s179 + $0x248] sm:$0xff]
        %v279 = vld [vmem:[%s179 + $0x250] sm:$0xff]
        %v280 = vld [vmem:[%s179 + $0x258] sm:$0xff]
        %v281 = vld [vmem:[%s179 + $0x260] sm:$0xff]
        %v282 = vld [vmem:[%s179 + $0x268] sm:$0xff]
        %v283 = vld [vmem:[%s179 + $0x270] sm:$0xff]
        %v284 = vld [vmem:[%s179 + $0x278] sm:$0xff]
        %v285 = vld [vmem:[%s179 + $0x280] sm:$0xff]
        %v286 = vld [vmem:[%s179 + $0x288] sm:$0xff]
        %v287 = vld [vmem:[%s179 + $0x290] sm:$0xff]
        %v288 = vld [vmem:[%s179 + $0x298] sm:$0xff]
        %v289 = vld [vmem:[%s179 + $0x2a0] sm:$0xff]
        %v290 = vld [vmem:[%s179 + $0x2a8] sm:$0xff]
        %v291 = vld [vmem:[%s179 + $0x2b0] sm:$0xff]
        %v292 = vld [vmem:[%s179 + $0x2b8] sm:$0xff]
        %v293 = vld [vmem:[%s179 + $0x2c0] sm:$0xff]
        %v294 = vld [vmem:[%s179 + $0x2c8] sm:$0xff]
        %v295 = vld [vmem:[%s179 + $0x2d0] sm:$0xff]
        %v296 = vld [vmem:[%s179 + $0x2d8] sm:$0xff]
        %v297 = vld [vmem:[%s179 + $0x2e0] sm:$0xff]
        %v298 = vld [vmem:[%s179 + $0x2e8] sm:$0xff]
        %v299 = vld [vmem:[%s179 + $0x2f0] sm:$0xff]
        %v300 = vld [vmem:[%s179 + $0x2f8] sm:$0xff]
        %v301 = vld [vmem:[%s179 + $0x300] sm:$0xff]
        %v302 = vld [vmem:[%s179 + $0x308] sm:$0xff]
        %v303 = vld [vmem:[%s179 + $0x310] sm:$0xff]
        %v304 = vld [vmem:[%s179 + $0x318] sm:$0xff]
        %v305 = vld [vmem:[%s179 + $0x320] sm:$0xff]
        %v306 = vld [vmem:[%s179 + $0x328] sm:$0xff]
        %v307 = vld [vmem:[%s179 + $0x330] sm:$0xff]
        %v308 = vld [vmem:[%s179 + $0x338] sm:$0xff]
        %v309 = vld [vmem:[%s179 + $0x340] sm:$0xff]
        %v310 = vld [vmem:[%s179 + $0x348] sm:$0xff]
        %v311 = vld [vmem:[%s179 + $0x350] sm:$0xff]
        %v312 = vld [vmem:[%s179 + $0x358] sm:$0xff]
        %v313 = vld [vmem:[%s179 + $0x360] sm:$0xff]
        %v314 = vld [vmem:[%s179 + $0x368] sm:$0xff]
        %v315 = vld [vmem:[%s179 + $0x370] sm:$0xff]
        %v316 = vld [vmem:[%s179 + $0x378] sm:$0xff]
        %v317 = vld [vmem:[%s179 + $0x380] sm:$0xff]
        %v318 = vld [vmem:[%s179 + $0x388] sm:$0xff]
        %v319 = vld [vmem:[%s179 + $0x390] sm:$0xff]
        %v320 = vld [vmem:[%s179 + $0x398] sm:$0xff]
        %v321 = vld [vmem:[%s179 + $0x3a0] sm:$0xff]
        %v322 = vld [vmem:[%s179 + $0x3a8] sm:$0xff]
        %v323 = vld [vmem:[%s179 + $0x3b0] sm:$0xff]
        %v324 = vld [vmem:[%s179 + $0x3b8] sm:$0xff]
        %v325 = vld [vmem:[%s179 + $0x3c0] sm:$0xff]
        %v326 = vld [vmem:[%s179 + $0x3c8] sm:$0xff]
        %v327 = vld [vmem:[%s179 + $0x3d0] sm:$0xff]
        %v328 = vld [vmem:[%s179 + $0x3d8] sm:$0xff]
        %v329 = vld [vmem:[%s179 + $0x3e0] sm:$0xff]
        %v330 = vld [vmem:[%s179 + $0x3e8] sm:$0xff]
        %v331 = vld [vmem:[%s179 + $0x3f0] sm:$0xff]
        %v332 = vld [vmem:[%s179 + $0x3f8] sm:$0xff]
        %v333 = vld [vmem:[%s179 + $0x400] sm:$0xff]
        %v334 = vld [vmem:[%s179 + $0x408] sm:$0xff]
        %v335 = vld [vmem:[%s179 + $0x410] sm:$0xff]
        %v336 = vld [vmem:[%s179 + $0x418] sm:$0xff]
        %v337 = vld [vmem:[%s179 + $0x420] sm:$0xff]
        %v338 = vld [vmem:[%s179 + $0x428] sm:$0xff]
        %v339 = vld [vmem:[%s179 + $0x430] sm:$0xff]
        %v340 = vld [vmem:[%s179 + $0x438] sm:$0xff]
        %v341 = vld [vmem:[%s179 + $0x440] sm:$0xff]
        %v342 = vld [vmem:[%s179 + $0x448] sm:$0xff]
        %v343 = vld [vmem:[%s179 + $0x450] sm:$0xff]
        %v344 = vld [vmem:[%s179 + $0x458] sm:$0xff]
        %v345 = vld [vmem:[%s179 + $0x460] sm:$0xff]
        %v346 = vld [vmem:[%s179 + $0x468] sm:$0xff]
        %v347 = vld [vmem:[%s179 + $0x470] sm:$0xff]
        %v348 = vld [vmem:[%s179 + $0x478] sm:$0xff]
        %v349 = vld [vmem:[%s179 + $0x480] sm:$0xff]
        %v350 = vld [vmem:[%s179 + $0x488] sm:$0xff]
        %v351 = vld [vmem:[%s179 + $0x490] sm:$0xff]
        %v352 = vld [vmem:[%s179 + $0x498] sm:$0xff]
        %v353 = vld [vmem:[%s179 + $0x4a0] sm:$0xff]
        %v354 = vld [vmem:[%s179 + $0x4a8] sm:$0xff]
        %v355 = vld [vmem:[%s179 + $0x4b0] sm:$0xff]
        %v356 = vld [vmem:[%s179 + $0x4b8] sm:$0xff]
        %v357 = vld [vmem:[%s179 + $0x4c0] sm:$0xff]
        %v358 = vld [vmem:[%s179 + $0x4c8] sm:$0xff]
        %v359 = vld [vmem:[%s179 + $0x4d0] sm:$0xff]
        %v360 = vld [vmem:[%s179 + $0x4d8] sm:$0xff]
        %v361 = vld [vmem:[%s179 + $0x4e0] sm:$0xff]
        %v362 = vld [vmem:[%s179 + $0x4e8] sm:$0xff]
        %v363 = vld [vmem:[%s179 + $0x4f0] sm:$0xff]
        %v364 = vld [vmem:[%s179 + $0x4f8] sm:$0xff]
        %v365 = vld [vmem:[%s179 + $0x500] sm:$0xff]
        %v366 = vld [vmem:[%s179 + $0x508] sm:$0xff]
        %v367 = vld [vmem:[%s179 + $0x510] sm:$0xff]
        %v368 = vld [vmem:[%s179 + $0x518] sm:$0xff]
        %v369 = vld [vmem:[%s179 + $0x520] sm:$0xff]
        %v370 = vld [vmem:[%s179 + $0x528] sm:$0xff]
        %v371 = vld [vmem:[%s179 + $0x530] sm:$0xff]
        %v372 = vld [vmem:[%s179 + $0x538] sm:$0xff]
        %v373 = vld [vmem:[%s179 + $0x540] sm:$0xff]
        %v374 = vld [vmem:[%s179 + $0x548] sm:$0xff]
        %v375 = vld [vmem:[%s179 + $0x550] sm:$0xff]
        %v376 = vld [vmem:[%s179 + $0x558] sm:$0xff]
        %v377 = vld [vmem:[%s179 + $0x560] sm:$0xff]
        %v378 = vld [vmem:[%s179 + $0x568] sm:$0xff]
        %v379 = vld [vmem:[%s179 + $0x570] sm:$0xff]
        %v380 = vld [vmem:[%s179 + $0x578] sm:$0xff]
        %v381 = vld [vmem:[%s179 + $0x580] sm:$0xff]
        %v382 = vld [vmem:[%s179 + $0x588] sm:$0xff]
        %v383 = vld [vmem:[%s179 + $0x590] sm:$0xff]
        %v384 = vld [vmem:[%s179 + $0x598] sm:$0xff]
        %v385 = vld [vmem:[%s179 + $0x5a0] sm:$0xff]
        %v386 = vld [vmem:[%s179 + $0x5a8] sm:$0xff]
        %v387 = vld [vmem:[%s179 + $0x5b0] sm:$0xff]
        %v388 = vld [vmem:[%s179 + $0x5b8] sm:$0xff]
        %v389 = vld [vmem:[%s179 + $0x5c0] sm:$0xff]
        %v390 = vld [vmem:[%s179 + $0x5c8] sm:$0xff]
        %v391 = vld [vmem:[%s179 + $0x5d0] sm:$0xff]
        %v392 = vld [vmem:[%s179 + $0x5d8] sm:$0xff]
        %v393 = vld [vmem:[%s179 + $0x5e0] sm:$0xff]
        %v394 = vld [vmem:[%s179 + $0x5e8] sm:$0xff]
        %v395 = vld [vmem:[%s179 + $0x5f0] sm:$0xff]
        %v396 = vld [vmem:[%s179 + $0x5f8] sm:$0xff]
        %v397 = vld [vmem:[%s179 + $0x600] sm:$0xff]
        %v398 = vld [vmem:[%s179 + $0x608] sm:$0xff]
        %v399 = vld [vmem:[%s179 + $0x610] sm:$0xff]
        %v400 = vld [vmem:[%s179 + $0x618] sm:$0xff]
        %v401 = vld [vmem:[%s179 + $0x620] sm:$0xff]
        %v402 = vld [vmem:[%s179 + $0x628] sm:$0xff]
        %v403 = vld [vmem:[%s179 + $0x630] sm:$0xff]
        %v404 = vld [vmem:[%s179 + $0x638] sm:$0xff]
        %v405 = vld [vmem:[%s179 + $0x640] sm:$0xff]
        %v406 = vld [vmem:[%s179 + $0x648] sm:$0xff]
        %v407 = vld [vmem:[%s179 + $0x650] sm:$0xff]
        %v408 = vld [vmem:[%s179 + $0x658] sm:$0xff]
        %v409 = vld [vmem:[%s179 + $0x660] sm:$0xff]
        %v410 = vld [vmem:[%s179 + $0x668] sm:$0xff]
        %v411 = vld [vmem:[%s179 + $0x670] sm:$0xff]
        %v412 = vld [vmem:[%s179 + $0x678] sm:$0xff]
        %v413 = vld [vmem:[%s179 + $0x680] sm:$0xff]
        %v414 = vld [vmem:[%s179 + $0x688] sm:$0xff]
        %v415 = vld [vmem:[%s179 + $0x690] sm:$0xff]
        %v416 = vld [vmem:[%s179 + $0x698] sm:$0xff]
        %v417 = vld [vmem:[%s179 + $0x6a0] sm:$0xff]
        %v418 = vld [vmem:[%s179 + $0x6a8] sm:$0xff]
        %v419 = vld [vmem:[%s179 + $0x6b0] sm:$0xff]
        %v420 = vld [vmem:[%s179 + $0x6b8] sm:$0xff]
        %v421 = vld [vmem:[%s179 + $0x6c0] sm:$0xff]
        %v422 = vld [vmem:[%s179 + $0x6c8] sm:$0xff]
        %v423 = vld [vmem:[%s179 + $0x6d0] sm:$0xff]
        %v424 = vld [vmem:[%s179 + $0x6d8] sm:$0xff]
        %v425 = vld [vmem:[%s179 + $0x6e0] sm:$0xff]
        %v426 = vld [vmem:[%s179 + $0x6e8] sm:$0xff]
        %v427 = vld [vmem:[%s179 + $0x6f0] sm:$0xff]
        %v428 = vld [vmem:[%s179 + $0x6f8] sm:$0xff]
        %v429 = vld [vmem:[%s179 + $0x700] sm:$0xff]
        %v430 = vld [vmem:[%s179 + $0x708] sm:$0xff]
        %v431 = vld [vmem:[%s179 + $0x710] sm:$0xff]
        %v432 = vld [vmem:[%s179 + $0x718] sm:$0xff]
        %v433 = vld [vmem:[%s179 + $0x720] sm:$0xff]
        %v434 = vld [vmem:[%s179 + $0x728] sm:$0xff]
        %v435 = vld [vmem:[%s179 + $0x730] sm:$0xff]
        %v436 = vld [vmem:[%s179 + $0x738] sm:$0xff]
        %v437 = vld [vmem:[%s179 + $0x740] sm:$0xff]
        %v438 = vld [vmem:[%s179 + $0x748] sm:$0xff]
        %v439 = vld [vmem:[%s179 + $0x750] sm:$0xff]
        %v440 = vld [vmem:[%s179 + $0x758] sm:$0xff]
        %v441 = vld [vmem:[%s179 + $0x760] sm:$0xff]
        %v442 = vld [vmem:[%s179 + $0x768] sm:$0xff]
        %v443 = vld [vmem:[%s179 + $0x770] sm:$0xff]
        %v444 = vld [vmem:[%s179 + $0x778] sm:$0xff]
        %v445 = vld [vmem:[%s179 + $0x780] sm:$0xff]
        %v446 = vld [vmem:[%s179 + $0x788] sm:$0xff]
        %v447 = vld [vmem:[%s179 + $0x790] sm:$0xff]
        %v448 = vld [vmem:[%s179 + $0x798] sm:$0xff]
        %v449 = vld [vmem:[%s179 + $0x7a0] sm:$0xff]
        %v450 = vld [vmem:[%s179 + $0x7a8] sm:$0xff]
        %v451 = vld [vmem:[%s179 + $0x7b0] sm:$0xff]
        %v452 = vld [vmem:[%s179 + $0x7b8] sm:$0xff]
        %v453 = vld [vmem:[%s179 + $0x7c0] sm:$0xff]
        %v454 = vld [vmem:[%s179 + $0x7c8] sm:$0xff]
        %v455 = vld [vmem:[%s179 + $0x7d0] sm:$0xff]
        %v456 = vld [vmem:[%s179 + $0x7d8] sm:$0xff]
        %v457 = vld [vmem:[%s179 + $0x7e0] sm:$0xff]
        %v458 = vld [vmem:[%s179 + $0x7e8] sm:$0xff]
        %v459 = vld [vmem:[%s179 + $0x7f0] sm:$0xff]
        %v460 = vld [vmem:[%s179 + $0x7f8] sm:$0xff]
        %v461 = vld [vmem:[%s179 + $0x800] sm:$0xff]
        %v462 = vld [vmem:[%s179 + $0x808] sm:$0xff]
        %v463 = vld [vmem:[%s179 + $0x810] sm:$0xff]
        %v464 = vld [vmem:[%s179 + $0x818] sm:$0xff]
        %v465 = vld [vmem:[%s179 + $0x820] sm:$0xff]
        %v466 = vld [vmem:[%s179 + $0x828] sm:$0xff]
        %v467 = vld [vmem:[%s179 + $0x830] sm:$0xff]
        %v468 = vld [vmem:[%s179 + $0x838] sm:$0xff]
        %v469 = vld [vmem:[%s179 + $0x840] sm:$0xff]
        %v470 = vld [vmem:[%s179 + $0x848] sm:$0xff]
        %v471 = vld [vmem:[%s179 + $0x850] sm:$0xff]
        %v472 = vld [vmem:[%s179 + $0x858] sm:$0xff]
        %v473 = vld [vmem:[%s179 + $0x860] sm:$0xff]
        %v474 = vld [vmem:[%s179 + $0x868] sm:$0xff]
        %v475 = vld [vmem:[%s179 + $0x870] sm:$0xff]
        %v476 = vld [vmem:[%s179 + $0x878] sm:$0xff]
        %v477 = vld [vmem:[%s179 + $0x880] sm:$0xff]
        %v478 = vld [vmem:[%s179 + $0x888] sm:$0xff]
        %v479 = vld [vmem:[%s179 + $0x890] sm:$0xff]
        %v480 = vld [vmem:[%s179 + $0x898] sm:$0xff]
        %v481 = vld [vmem:[%s179 + $0x8a0] sm:$0xff]
        %v482 = vld [vmem:[%s179 + $0x8a8] sm:$0xff]
        %v483 = vld [vmem:[%s179 + $0x8b0] sm:$0xff]
        %v484 = vld [vmem:[%s179 + $0x8b8] sm:$0xff]
        %v485 = vld [vmem:[%s179 + $0x8c0] sm:$0xff]
        %v486 = vld [vmem:[%s179 + $0x8c8] sm:$0xff]
        %v487 = vld [vmem:[%s179 + $0x8d0] sm:$0xff]
        %v488 = vld [vmem:[%s179 + $0x8d8] sm:$0xff]
        %v489 = vld [vmem:[%s179 + $0x8e0] sm:$0xff]
        %v490 = vld [vmem:[%s179 + $0x8e8] sm:$0xff]
        %v491 = vld [vmem:[%s179 + $0x8f0] sm:$0xff]
        %v492 = vld [vmem:[%s179 + $0x8f8] sm:$0xff]
        %v493 = vld [vmem:[%s179 + $0x900] sm:$0xff]
        %v494 = vld [vmem:[%s179 + $0x908] sm:$0xff]
        %v495 = vld [vmem:[%s179 + $0x910] sm:$0xff]
        %v496 = vld [vmem:[%s179 + $0x918] sm:$0xff]
        %v497 = vld [vmem:[%s179 + $0x920] sm:$0xff]
        %v498 = vld [vmem:[%s179 + $0x928] sm:$0xff]
        %v499 = vld [vmem:[%s179 + $0x930] sm:$0xff]
        %v500 = vld [vmem:[%s179 + $0x938] sm:$0xff]
        %v501 = vld [vmem:[%s179 + $0x940] sm:$0xff]
        %v502 = vld [vmem:[%s179 + $0x948] sm:$0xff]
        %v503 = vld [vmem:[%s179 + $0x950] sm:$0xff]
        %v504 = vld [vmem:[%s179 + $0x958] sm:$0xff]
        %v505 = vld [vmem:[%s179 + $0x960] sm:$0xff]
        %v506 = vld [vmem:[%s179 + $0x968] sm:$0xff]
        %v507 = vld [vmem:[%s179 + $0x970] sm:$0xff]
        %v508 = vld [vmem:[%s179 + $0x978] sm:$0xff]
        %v509 = vld [vmem:[%s179 + $0x980] sm:$0xff]
        %v510 = vld [vmem:[%s179 + $0x988] sm:$0xff]
        %v511 = vld [vmem:[%s179 + $0x990] sm:$0xff]
        %v512 = vld [vmem:[%s179 + $0x998] sm:$0xff]
        %v513 = vld [vmem:[%s179 + $0x9a0] sm:$0xff]
        %v514 = vld [vmem:[%s179 + $0x9a8] sm:$0xff]
        %v515 = vld [vmem:[%s179 + $0x9b0] sm:$0xff]
        %v516 = vld [vmem:[%s179 + $0x9b8] sm:$0xff]
        %v517 = vld [vmem:[%s179 + $0x9c0] sm:$0xff]
        %v518 = vld [vmem:[%s179 + $0x9c8] sm:$0xff]
        %v519 = vld [vmem:[%s179 + $0x9d0] sm:$0xff]
        %v520 = vld [vmem:[%s179 + $0x9d8] sm:$0xff]
        %v521 = vld [vmem:[%s179 + $0x9e0] sm:$0xff]
        %v522 = vld [vmem:[%s179 + $0x9e8] sm:$0xff]
        %v523 = vld [vmem:[%s179 + $0x9f0] sm:$0xff]
        %v524 = vld [vmem:[%s179 + $0x9f8] sm:$0xff]
        %v525 = vld [vmem:[%s179 + $0xa00] sm:$0xff]
        %v526 = vld [vmem:[%s179 + $0xa08] sm:$0xff]
        %v527 = vld [vmem:[%s179 + $0xa10] sm:$0xff]
        %v528 = vld [vmem:[%s179 + $0xa18] sm:$0xff]
        %v529 = vld [vmem:[%s179 + $0xa20] sm:$0xff]
        %v530 = vld [vmem:[%s179 + $0xa28] sm:$0xff]
        %v531 = vld [vmem:[%s179 + $0xa30] sm:$0xff]
        %v532 = vld [vmem:[%s179 + $0xa38] sm:$0xff]
        %v533 = vld [vmem:[%s179 + $0xa40] sm:$0xff]
        %v534 = vld [vmem:[%s179 + $0xa48] sm:$0xff]
        %v535 = vld [vmem:[%s179 + $0xa50] sm:$0xff]
        %v536 = vld [vmem:[%s179 + $0xa58] sm:$0xff]
        %v537 = vld [vmem:[%s179 + $0xa60] sm:$0xff]
        %v538 = vld [vmem:[%s179 + $0xa68] sm:$0xff]
        %v539 = vld [vmem:[%s179 + $0xa70] sm:$0xff]
        %v540 = vld [vmem:[%s179 + $0xa78] sm:$0xff]
        %v541 = vld [vmem:[%s179 + $0xa80] sm:$0xff]
        %v542 = vld [vmem:[%s179 + $0xa88] sm:$0xff]
        %v543 = vld [vmem:[%s179 + $0xa90] sm:$0xff]
        %v544 = vld [vmem:[%s179 + $0xa98] sm:$0xff]
        %v545 = vld [vmem:[%s179 + $0xaa0] sm:$0xff]
        %v546 = vld [vmem:[%s179 + $0xaa8] sm:$0xff]
        %v547 = vld [vmem:[%s179 + $0xab0] sm:$0xff]
        %v548 = vld [vmem:[%s179 + $0xab8] sm:$0xff]
        %v549 = vld [vmem:[%s179 + $0xac0] sm:$0xff]
        %v550 = vld [vmem:[%s179 + $0xac8] sm:$0xff]
        %v551 = vld [vmem:[%s179 + $0xad0] sm:$0xff]
        %v552 = vld [vmem:[%s179 + $0xad8] sm:$0xff]
        %v553 = vld [vmem:[%s179 + $0xae0] sm:$0xff]
        %v554 = vld [vmem:[%s179 + $0xae8] sm:$0xff]
        %v555 = vld [vmem:[%s179 + $0xaf0] sm:$0xff]
        %v556 = vld [vmem:[%s179 + $0xaf8] sm:$0xff]
        %v557 = vld [vmem:[%s179 + $0xb00] sm:$0xff]
        %v558 = vld [vmem:[%s179 + $0xb08] sm:$0xff]
        %v559 = vld [vmem:[%s179 + $0xb10] sm:$0xff]
        %v560 = vld [vmem:[%s179 + $0xb18] sm:$0xff]
        %v561 = vld [vmem:[%s179 + $0xb20] sm:$0xff]
        %v562 = vld [vmem:[%s179 + $0xb28] sm:$0xff]
        %v563 = vld [vmem:[%s179 + $0xb30] sm:$0xff]
        %v564 = vld [vmem:[%s179 + $0xb38] sm:$0xff]
        %v565 = vld [vmem:[%s179 + $0xb40] sm:$0xff]
        %v566 = vld [vmem:[%s179 + $0xb48] sm:$0xff]
        %v567 = vld [vmem:[%s179 + $0xb50] sm:$0xff]
        %v568 = vld [vmem:[%s179 + $0xb58] sm:$0xff]
        %v569 = vld [vmem:[%s179 + $0xb60] sm:$0xff]
        %v570 = vld [vmem:[%s179 + $0xb68] sm:$0xff]
        %v571 = vld [vmem:[%s179 + $0xb70] sm:$0xff]
        %v572 = vld [vmem:[%s179 + $0xb78] sm:$0xff]
        %v573 = vld [vmem:[%s179 + $0xb80] sm:$0xff]
        %v574 = vld [vmem:[%s179 + $0xb88] sm:$0xff]
        %v575 = vld [vmem:[%s179 + $0xb90] sm:$0xff]
        %v576 = vld [vmem:[%s179 + $0xb98] sm:$0xff]
        %v577 = vld [vmem:[%s179 + $0xba0] sm:$0xff]
        %v578 = vld [vmem:[%s179 + $0xba8] sm:$0xff]
        %v579 = vld [vmem:[%s179 + $0xbb0] sm:$0xff]
        %v580 = vld [vmem:[%s179 + $0xbb8] sm:$0xff]
        %v581 = vld [vmem:[%s179 + $0xbc0] sm:$0xff]
        %v582 = vld [vmem:[%s179 + $0xbc8] sm:$0xff]
        %v583 = vld [vmem:[%s179 + $0xbd0] sm:$0xff]
        %v584 = vld [vmem:[%s179 + $0xbd8] sm:$0xff]
        %v585 = vld [vmem:[%s179 + $0xbe0] sm:$0xff]
        %v586 = vld [vmem:[%s179 + $0xbe8] sm:$0xff]
        %v587 = vld [vmem:[%s179 + $0xbf0] sm:$0xff]
        %v588 = vld [vmem:[%s179 + $0xbf8] sm:$0xff]
        %v589 = vld [vmem:[%s179 + $0xc00] sm:$0xff]
        %v590 = vld [vmem:[%s179 + $0xc08] sm:$0xff]
        %v591 = vld [vmem:[%s179 + $0xc10] sm:$0xff]
        %v592 = vld [vmem:[%s179 + $0xc18] sm:$0xff]
        %v593 = vld [vmem:[%s179 + $0xc20] sm:$0xff]
        %v594 = vld [vmem:[%s179 + $0xc28] sm:$0xff]
        %v595 = vld [vmem:[%s179 + $0xc30] sm:$0xff]
        %v596 = vld [vmem:[%s179 + $0xc38] sm:$0xff]
        %v597 = vld [vmem:[%s179 + $0xc40] sm:$0xff]
        %v598 = vld [vmem:[%s179 + $0xc48] sm:$0xff]
        %v599 = vld [vmem:[%s179 + $0xc50] sm:$0xff]
        %v600 = vld [vmem:[%s179 + $0xc58] sm:$0xff]
        %v601 = vld [vmem:[%s179 + $0xc60] sm:$0xff]
        %v602 = vld [vmem:[%s179 + $0xc68] sm:$0xff]
        %v603 = vld [vmem:[%s179 + $0xc70] sm:$0xff]
        %v604 = vld [vmem:[%s179 + $0xc78] sm:$0xff]
        %v605 = vld [vmem:[%s179 + $0xc80] sm:$0xff]
        %v606 = vld [vmem:[%s179 + $0xc88] sm:$0xff]
        %v607 = vld [vmem:[%s179 + $0xc90] sm:$0xff]
        %v608 = vld [vmem:[%s179 + $0xc98] sm:$0xff]
        %v609 = vld [vmem:[%s179 + $0xca0] sm:$0xff]
        %v610 = vld [vmem:[%s179 + $0xca8] sm:$0xff]
        %v611 = vld [vmem:[%s179 + $0xcb0] sm:$0xff]
        %v612 = vld [vmem:[%s179 + $0xcb8] sm:$0xff]
        %v613 = vld [vmem:[%s179 + $0xcc0] sm:$0xff]
        %v614 = vld [vmem:[%s179 + $0xcc8] sm:$0xff]
        %v615 = vld [vmem:[%s179 + $0xcd0] sm:$0xff]
        %v616 = vld [vmem:[%s179 + $0xcd8] sm:$0xff]
        %v617 = vld [vmem:[%s179 + $0xce0] sm:$0xff]
        %v618 = vld [vmem:[%s179 + $0xce8] sm:$0xff]
        %v619 = vld [vmem:[%s179 + $0xcf0] sm:$0xff]
        %v620 = vld [vmem:[%s179 + $0xcf8] sm:$0xff]
        %v621 = vld [vmem:[%s179 + $0xd00] sm:$0xff]
        %v622 = vld [vmem:[%s179 + $0xd08] sm:$0xff]
        %v623 = vld [vmem:[%s179 + $0xd10] sm:$0xff]
        %v624 = vld [vmem:[%s179 + $0xd18] sm:$0xff]
        %v625 = vld [vmem:[%s179 + $0xd20] sm:$0xff]
        %v626 = vld [vmem:[%s179 + $0xd28] sm:$0xff]
        %v627 = vld [vmem:[%s179 + $0xd30] sm:$0xff]
        %v628 = vld [vmem:[%s179 + $0xd38] sm:$0xff]
        %v629 = vld [vmem:[%s179 + $0xd40] sm:$0xff]
        %v630 = vld [vmem:[%s179 + $0xd48] sm:$0xff]
        %v631 = vld [vmem:[%s179 + $0xd50] sm:$0xff]
        %v632 = vld [vmem:[%s179 + $0xd58] sm:$0xff]
        %v633 = vld [vmem:[%s179 + $0xd60] sm:$0xff]
        %v634 = vld [vmem:[%s179 + $0xd68] sm:$0xff]
        %v635 = vld [vmem:[%s179 + $0xd70] sm:$0xff]
        %v636 = vld [vmem:[%s179 + $0xd78] sm:$0xff]
        %v637 = vld [vmem:[%s179 + $0xd80] sm:$0xff]
        %v638 = vld [vmem:[%s179 + $0xd88] sm:$0xff]
        %v639 = vld [vmem:[%s179 + $0xd90] sm:$0xff]
        %v640 = vld [vmem:[%s179 + $0xd98] sm:$0xff]
        %v641 = vld [vmem:[%s179 + $0xda0] sm:$0xff]
        %v642 = vld [vmem:[%s179 + $0xda8] sm:$0xff]
        %v643 = vld [vmem:[%s179 + $0xdb0] sm:$0xff]
        %v644 = vld [vmem:[%s179 + $0xdb8] sm:$0xff]
        %v645 = vld [vmem:[%s179 + $0xdc0] sm:$0xff]
        %v646 = vld [vmem:[%s179 + $0xdc8] sm:$0xff]
        %v647 = vld [vmem:[%s179 + $0xdd0] sm:$0xff]
        %v648 = vld [vmem:[%s179 + $0xdd8] sm:$0xff]
        %v649 = vld [vmem:[%s179 + $0xde0] sm:$0xff]
        %v650 = vld [vmem:[%s179 + $0xde8] sm:$0xff]
        %v651 = vld [vmem:[%s179 + $0xdf0] sm:$0xff]
        %v652 = vld [vmem:[%s179 + $0xdf8] sm:$0xff]
        %v653 = vld [vmem:[%s179 + $0xe00] sm:$0xff]
        %v654 = vld [vmem:[%s179 + $0xe08] sm:$0xff]
        %v655 = vld [vmem:[%s179 + $0xe10] sm:$0xff]
        %v656 = vld [vmem:[%s179 + $0xe18] sm:$0xff]
        %v657 = vld [vmem:[%s179 + $0xe20] sm:$0xff]
        %v658 = vld [vmem:[%s179 + $0xe28] sm:$0xff]
        %v659 = vld [vmem:[%s179 + $0xe30] sm:$0xff]
        %v660 = vld [vmem:[%s179 + $0xe38] sm:$0xff]
        %v661 = vld [vmem:[%s179 + $0xe40] sm:$0xff]
        %v662 = vld [vmem:[%s179 + $0xe48] sm:$0xff]
        %v663 = vld [vmem:[%s179 + $0xe50] sm:$0xff]
        %v664 = vld [vmem:[%s179 + $0xe58] sm:$0xff]
        %v665 = vld [vmem:[%s179 + $0xe60] sm:$0xff]
        %v666 = vld [vmem:[%s179 + $0xe68] sm:$0xff]
        %v667 = vld [vmem:[%s179 + $0xe70] sm:$0xff]
        %v668 = vld [vmem:[%s179 + $0xe78] sm:$0xff]
        %v669 = vld [vmem:[%s179 + $0xe80] sm:$0xff]
        %v670 = vld [vmem:[%s179 + $0xe88] sm:$0xff]
        %v671 = vld [vmem:[%s179 + $0xe90] sm:$0xff]
        %v672 = vld [vmem:[%s179 + $0xe98] sm:$0xff]
        %v673 = vld [vmem:[%s179 + $0xea0] sm:$0xff]
        %v674 = vld [vmem:[%s179 + $0xea8] sm:$0xff]
        %v675 = vld [vmem:[%s179 + $0xeb0] sm:$0xff]
        %v676 = vld [vmem:[%s179 + $0xeb8] sm:$0xff]
        %v677 = vld [vmem:[%s179 + $0xec0] sm:$0xff]
        %v678 = vld [vmem:[%s179 + $0xec8] sm:$0xff]
        %v679 = vld [vmem:[%s179 + $0xed0] sm:$0xff]
        %v680 = vld [vmem:[%s179 + $0xed8] sm:$0xff]
        %v681 = vld [vmem:[%s179 + $0xee0] sm:$0xff]
        %v682 = vld [vmem:[%s179 + $0xee8] sm:$0xff]
        %v683 = vld [vmem:[%s179 + $0xef0] sm:$0xff]
        %v684 = vld [vmem:[%s179 + $0xef8] sm:$0xff]
        %v685 = vld [vmem:[%s179 + $0xf00] sm:$0xff]
        %v686 = vld [vmem:[%s179 + $0xf08] sm:$0xff]
        %v687 = vld [vmem:[%s179 + $0xf10] sm:$0xff]
        %v688 = vld [vmem:[%s179 + $0xf18] sm:$0xff]
        %v689 = vld [vmem:[%s179 + $0xf20] sm:$0xff]
        %v690 = vld [vmem:[%s179 + $0xf28] sm:$0xff]
        %v691 = vld [vmem:[%s179 + $0xf30] sm:$0xff]
        %v692 = vld [vmem:[%s179 + $0xf38] sm:$0xff]
        %v693 = vld [vmem:[%s179 + $0xf40] sm:$0xff]
        %v694 = vld [vmem:[%s179 + $0xf48] sm:$0xff]
        %v695 = vld [vmem:[%s179 + $0xf50] sm:$0xff]
        %v696 = vld [vmem:[%s179 + $0xf58] sm:$0xff]
        %v697 = vld [vmem:[%s179 + $0xf60] sm:$0xff]
        %v698 = vld [vmem:[%s179 + $0xf68] sm:$0xff]
        %v699 = vld [vmem:[%s179 + $0xf70] sm:$0xff]
        %v700 = vld [vmem:[%s179 + $0xf78] sm:$0xff]
        %v701 = vld [vmem:[%s179 + $0xf80] sm:$0xff]
        %v702 = vld [vmem:[%s179 + $0xf88] sm:$0xff]
        %v703 = vld [vmem:[%s179 + $0xf90] sm:$0xff]
        %v704 = vld [vmem:[%s179 + $0xf98] sm:$0xff]
        %v705 = vld [vmem:[%s179 + $0xfa0] sm:$0xff]
        %v706 = vld [vmem:[%s179 + $0xfa8] sm:$0xff]
        %v707 = vld [vmem:[%s179 + $0xfb0] sm:$0xff]
        %v708 = vld [vmem:[%s179 + $0xfb8] sm:$0xff]
        %v709 = vld [vmem:[%s179 + $0xfc0] sm:$0xff]
        %v710 = vld [vmem:[%s179 + $0xfc8] sm:$0xff]
        %v711 = vld [vmem:[%s179 + $0xfd0] sm:$0xff]
        %v712 = vld [vmem:[%s179 + $0xfd8] sm:$0xff]
        %v713 = vld [vmem:[%s179 + $0xfe0] sm:$0xff]
        %v714 = vld [vmem:[%s179 + $0xfe8] sm:$0xff]
        %v715 = vld [vmem:[%s179 + $0xff0] sm:$0xff]
        %v716 = vld [vmem:[%s179 + $0xff8] sm:$0xff]
        %717 = vmatpush.msra.mxu0 %v445
        %718 = vmatpush.msra.mxu0 %v429
        %719 = vmatpush.msra.mxu0 %v413
        %720 = vmatpush.msra.mxu0 %v397
        %721 = vmatpush.msra.mxu0 %v381
        %722 = vmatpush.msra.mxu0 %v365
        %723 = vmatpush.msra.mxu0 %v349
        %724 = vmatpush.msra.mxu0 %v333
        %725 = vmatpush.msra.mxu0 %v317
        %726 = vmatpush.msra.mxu0 %v301
        %727 = vmatpush.msra.mxu0 %v285
        %728 = vmatpush.msra.mxu0 %v269
        %729 = vmatpush.msra.mxu0 %v253
        %730 = vmatpush.msra.mxu0 %v237
        %731 = vmatpush.msra.mxu0 %v221
        %732 = vmatpush.msra.mxu0 %v205
        %733 = vmatmul.f32.gmra.mxu0 %v203
        %v734 = vpop.f32.mrf.mxu0
        %v735 = vadd.f32 0.0, %v734
        %736 = vdwg.mxu0
        %737 = vmatpush.msra.mxu0 %v701
        %738 = vmatpush.msra.mxu0 %v685
        %739 = vmatpush.msra.mxu0 %v669
        %740 = vmatpush.msra.mxu0 %v653
        %741 = vmatpush.msra.mxu0 %v637
        %742 = vmatpush.msra.mxu0 %v621
        %743 = vmatpush.msra.mxu0 %v605
        %744 = vmatpush.msra.mxu0 %v589
        %745 = vmatpush.msra.mxu0 %v573
        %746 = vmatpush.msra.mxu0 %v557
        %747 = vmatpush.msra.mxu0 %v541
        %748 = vmatpush.msra.mxu0 %v525
        %749 = vmatpush.msra.mxu0 %v509
        %750 = vmatpush.msra.mxu0 %v493
        %751 = vmatpush.msra.mxu0 %v477
        %752 = vmatpush.msra.mxu0 %v461
        %753 = vmatmul.f32.gmra.mxu0 %v204
        %v754 = vpop.f32.mrf.mxu0
        %v755 = vadd.f32 %v735, %v754
        %756 = vdwg.mxu0
        %757 = vmatpush.msra.mxu0 %v446
        %758 = vmatpush.msra.mxu0 %v430
        %759 = vmatpush.msra.mxu0 %v414
        %760 = vmatpush.msra.mxu0 %v398
        %761 = vmatpush.msra.mxu0 %v382
        %762 = vmatpush.msra.mxu0 %v366
        %763 = vmatpush.msra.mxu0 %v350
        %764 = vmatpush.msra.mxu0 %v334
        %765 = vmatpush.msra.mxu0 %v318
        %766 = vmatpush.msra.mxu0 %v302
        %767 = vmatpush.msra.mxu0 %v286
        %768 = vmatpush.msra.mxu0 %v270
        %769 = vmatpush.msra.mxu0 %v254
        %770 = vmatpush.msra.mxu0 %v238
        %771 = vmatpush.msra.mxu0 %v222
        %772 = vmatpush.msra.mxu0 %v206
        %773 = vmatmul.f32.gmra.mxu0 %v203
        %v774 = vpop.f32.mrf.mxu0
        %v775 = vadd.f32 0.0, %v774
        %776 = vdwg.mxu0
        %777 = vmatpush.msra.mxu0 %v702
        %778 = vmatpush.msra.mxu0 %v686
        %779 = vmatpush.msra.mxu0 %v670
        %780 = vmatpush.msra.mxu0 %v654
        %781 = vmatpush.msra.mxu0 %v638
        %782 = vmatpush.msra.mxu0 %v622
        %783 = vmatpush.msra.mxu0 %v606
        %784 = vmatpush.msra.mxu0 %v590
        %785 = vmatpush.msra.mxu0 %v574
        %786 = vmatpush.msra.mxu0 %v558
        %787 = vmatpush.msra.mxu0 %v542
        %788 = vmatpush.msra.mxu0 %v526
        %789 = vmatpush.msra.mxu0 %v510
        %790 = vmatpush.msra.mxu0 %v494
        %791 = vmatpush.msra.mxu0 %v478
        %792 = vmatpush.msra.mxu0 %v462
        %793 = vmatmul.f32.gmra.mxu0 %v204
        %v794 = vpop.f32.mrf.mxu0
        %v795 = vadd.f32 %v775, %v794
        %796 = vdwg.mxu0
        %797 = vmatpush.msra.mxu0 %v447
        %798 = vmatpush.msra.mxu0 %v431
        %799 = vmatpush.msra.mxu0 %v415
        %800 = vmatpush.msra.mxu0 %v399
        %801 = vmatpush.msra.mxu0 %v383
        %802 = vmatpush.msra.mxu0 %v367
        %803 = vmatpush.msra.mxu0 %v351
        %804 = vmatpush.msra.mxu0 %v335
        %805 = vmatpush.msra.mxu0 %v319
        %806 = vmatpush.msra.mxu0 %v303
        %807 = vmatpush.msra.mxu0 %v287
        %808 = vmatpush.msra.mxu0 %v271
        %809 = vmatpush.msra.mxu0 %v255
        %810 = vmatpush.msra.mxu0 %v239
        %811 = vmatpush.msra.mxu0 %v223
        %812 = vmatpush.msra.mxu0 %v207
        %813 = vmatmul.f32.gmra.mxu0 %v203
        %v814 = vpop.f32.mrf.mxu0
        %v815 = vadd.f32 0.0, %v814
        %816 = vdwg.mxu0
        %817 = vmatpush.msra.mxu0 %v703
        %818 = vmatpush.msra.mxu0 %v687
        %819 = vmatpush.msra.mxu0 %v671
        %820 = vmatpush.msra.mxu0 %v655
        %821 = vmatpush.msra.mxu0 %v639
        %822 = vmatpush.msra.mxu0 %v623
        %823 = vmatpush.msra.mxu0 %v607
        %824 = vmatpush.msra.mxu0 %v591
        %825 = vmatpush.msra.mxu0 %v575
        %826 = vmatpush.msra.mxu0 %v559
        %827 = vmatpush.msra.mxu0 %v543
        %828 = vmatpush.msra.mxu0 %v527
        %829 = vmatpush.msra.mxu0 %v511
        %830 = vmatpush.msra.mxu0 %v495
        %831 = vmatpush.msra.mxu0 %v479
        %832 = vmatpush.msra.mxu0 %v463
        %833 = vmatmul.f32.gmra.mxu0 %v204
        %v834 = vpop.f32.mrf.mxu0
        %v835 = vadd.f32 %v815, %v834
        %836 = vdwg.mxu0
        %837 = vmatpush.msra.mxu0 %v448
        %838 = vmatpush.msra.mxu0 %v432
        %839 = vmatpush.msra.mxu0 %v416
        %840 = vmatpush.msra.mxu0 %v400
        %841 = vmatpush.msra.mxu0 %v384
        %842 = vmatpush.msra.mxu0 %v368
        %843 = vmatpush.msra.mxu0 %v352
        %844 = vmatpush.msra.mxu0 %v336
        %845 = vmatpush.msra.mxu0 %v320
        %846 = vmatpush.msra.mxu0 %v304
        %847 = vmatpush.msra.mxu0 %v288
        %848 = vmatpush.msra.mxu0 %v272
        %849 = vmatpush.msra.mxu0 %v256
        %850 = vmatpush.msra.mxu0 %v240
        %851 = vmatpush.msra.mxu0 %v224
        %852 = vmatpush.msra.mxu0 %v208
        %853 = vmatmul.f32.gmra.mxu0 %v203
        %v854 = vpop.f32.mrf.mxu0
        %v855 = vadd.f32 0.0, %v854
        %856 = vdwg.mxu0
        %857 = vmatpush.msra.mxu0 %v704
        %858 = vmatpush.msra.mxu0 %v688
        %859 = vmatpush.msra.mxu0 %v672
        %860 = vmatpush.msra.mxu0 %v656
        %861 = vmatpush.msra.mxu0 %v640
        %862 = vmatpush.msra.mxu0 %v624
        %863 = vmatpush.msra.mxu0 %v608
        %864 = vmatpush.msra.mxu0 %v592
        %865 = vmatpush.msra.mxu0 %v576
        %866 = vmatpush.msra.mxu0 %v560
        %867 = vmatpush.msra.mxu0 %v544
        %868 = vmatpush.msra.mxu0 %v528
        %869 = vmatpush.msra.mxu0 %v512
        %870 = vmatpush.msra.mxu0 %v496
        %871 = vmatpush.msra.mxu0 %v480
        %872 = vmatpush.msra.mxu0 %v464
        %873 = vmatmul.f32.gmra.mxu0 %v204
        %v874 = vpop.f32.mrf.mxu0
        %v875 = vadd.f32 %v855, %v874
        %876 = vdwg.mxu0
        %877 = vmatpush.msra.mxu0 %v449
        %878 = vmatpush.msra.mxu0 %v433
        %879 = vmatpush.msra.mxu0 %v417
        %880 = vmatpush.msra.mxu0 %v401
        %881 = vmatpush.msra.mxu0 %v385
        %882 = vmatpush.msra.mxu0 %v369
        %883 = vmatpush.msra.mxu0 %v353
        %884 = vmatpush.msra.mxu0 %v337
        %885 = vmatpush.msra.mxu0 %v321
        %886 = vmatpush.msra.mxu0 %v305
        %887 = vmatpush.msra.mxu0 %v289
        %888 = vmatpush.msra.mxu0 %v273
        %889 = vmatpush.msra.mxu0 %v257
        %890 = vmatpush.msra.mxu0 %v241
        %891 = vmatpush.msra.mxu0 %v225
        %892 = vmatpush.msra.mxu0 %v209
        %893 = vmatmul.f32.gmra.mxu0 %v203
        %v894 = vpop.f32.mrf.mxu0
        %v895 = vadd.f32 0.0, %v894
        %896 = vdwg.mxu0
        %897 = vmatpush.msra.mxu0 %v705
        %898 = vmatpush.msra.mxu0 %v689
        %899 = vmatpush.msra.mxu0 %v673
        %900 = vmatpush.msra.mxu0 %v657
        %901 = vmatpush.msra.mxu0 %v641
        %902 = vmatpush.msra.mxu0 %v625
        %903 = vmatpush.msra.mxu0 %v609
        %904 = vmatpush.msra.mxu0 %v593
        %905 = vmatpush.msra.mxu0 %v577
        %906 = vmatpush.msra.mxu0 %v561
        %907 = vmatpush.msra.mxu0 %v545
        %908 = vmatpush.msra.mxu0 %v529
        %909 = vmatpush.msra.mxu0 %v513
        %910 = vmatpush.msra.mxu0 %v497
        %911 = vmatpush.msra.mxu0 %v481
        %912 = vmatpush.msra.mxu0 %v465
        %913 = vmatmul.f32.gmra.mxu0 %v204
        %v914 = vpop.f32.mrf.mxu0
        %v915 = vadd.f32 %v895, %v914
        %916 = vdwg.mxu0
        %917 = vmatpush.msra.mxu0 %v450
        %918 = vmatpush.msra.mxu0 %v434
        %919 = vmatpush.msra.mxu0 %v418
        %920 = vmatpush.msra.mxu0 %v402
        %921 = vmatpush.msra.mxu0 %v386
        %922 = vmatpush.msra.mxu0 %v370
        %923 = vmatpush.msra.mxu0 %v354
        %924 = vmatpush.msra.mxu0 %v338
        %925 = vmatpush.msra.mxu0 %v322
        %926 = vmatpush.msra.mxu0 %v306
        %927 = vmatpush.msra.mxu0 %v290
        %928 = vmatpush.msra.mxu0 %v274
        %929 = vmatpush.msra.mxu0 %v258
        %930 = vmatpush.msra.mxu0 %v242
        %931 = vmatpush.msra.mxu0 %v226
        %932 = vmatpush.msra.mxu0 %v210
        %933 = vmatmul.f32.gmra.mxu0 %v203
        %v934 = vpop.f32.mrf.mxu0
        %v935 = vadd.f32 0.0, %v934
        %936 = vdwg.mxu0
        %937 = vmatpush.msra.mxu0 %v706
        %938 = vmatpush.msra.mxu0 %v690
        %939 = vmatpush.msra.mxu0 %v674
        %940 = vmatpush.msra.mxu0 %v658
        %941 = vmatpush.msra.mxu0 %v642
        %942 = vmatpush.msra.mxu0 %v626
        %943 = vmatpush.msra.mxu0 %v610
        %944 = vmatpush.msra.mxu0 %v594
        %945 = vmatpush.msra.mxu0 %v578
        %946 = vmatpush.msra.mxu0 %v562
        %947 = vmatpush.msra.mxu0 %v546
        %948 = vmatpush.msra.mxu0 %v530
        %949 = vmatpush.msra.mxu0 %v514
        %950 = vmatpush.msra.mxu0 %v498
        %951 = vmatpush.msra.mxu0 %v482
        %952 = vmatpush.msra.mxu0 %v466
        %953 = vmatmul.f32.gmra.mxu0 %v204
        %v954 = vpop.f32.mrf.mxu0
        %v955 = vadd.f32 %v935, %v954
        %956 = vdwg.mxu0
        %957 = vmatpush.msra.mxu0 %v451
        %958 = vmatpush.msra.mxu0 %v435
        %959 = vmatpush.msra.mxu0 %v419
        %960 = vmatpush.msra.mxu0 %v403
        %961 = vmatpush.msra.mxu0 %v387
        %962 = vmatpush.msra.mxu0 %v371
        %963 = vmatpush.msra.mxu0 %v355
        %964 = vmatpush.msra.mxu0 %v339
        %965 = vmatpush.msra.mxu0 %v323
        %966 = vmatpush.msra.mxu0 %v307
        %967 = vmatpush.msra.mxu0 %v291
        %968 = vmatpush.msra.mxu0 %v275
        %969 = vmatpush.msra.mxu0 %v259
        %970 = vmatpush.msra.mxu0 %v243
        %971 = vmatpush.msra.mxu0 %v227
        %972 = vmatpush.msra.mxu0 %v211
        %973 = vmatmul.f32.gmra.mxu0 %v203
        %v974 = vpop.f32.mrf.mxu0
        %v975 = vadd.f32 0.0, %v974
        %976 = vdwg.mxu0
        %977 = vmatpush.msra.mxu0 %v707
        %978 = vmatpush.msra.mxu0 %v691
        %979 = vmatpush.msra.mxu0 %v675
        %980 = vmatpush.msra.mxu0 %v659
        %981 = vmatpush.msra.mxu0 %v643
        %982 = vmatpush.msra.mxu0 %v627
        %983 = vmatpush.msra.mxu0 %v611
        %984 = vmatpush.msra.mxu0 %v595
        %985 = vmatpush.msra.mxu0 %v579
        %986 = vmatpush.msra.mxu0 %v563
        %987 = vmatpush.msra.mxu0 %v547
        %988 = vmatpush.msra.mxu0 %v531
        %989 = vmatpush.msra.mxu0 %v515
        %990 = vmatpush.msra.mxu0 %v499
        %991 = vmatpush.msra.mxu0 %v483
        %992 = vmatpush.msra.mxu0 %v467
        %993 = vmatmul.f32.gmra.mxu0 %v204
        %v994 = vpop.f32.mrf.mxu0
        %v995 = vadd.f32 %v975, %v994
        %996 = vdwg.mxu0
        %997 = vmatpush.msra.mxu0 %v452
        %998 = vmatpush.msra.mxu0 %v436
        %999 = vmatpush.msra.mxu0 %v420
        %1000 = vmatpush.msra.mxu0 %v404
        %1001 = vmatpush.msra.mxu0 %v388
        %1002 = vmatpush.msra.mxu0 %v372
        %1003 = vmatpush.msra.mxu0 %v356
        %1004 = vmatpush.msra.mxu0 %v340
        %1005 = vmatpush.msra.mxu0 %v324
        %1006 = vmatpush.msra.mxu0 %v308
        %1007 = vmatpush.msra.mxu0 %v292
        %1008 = vmatpush.msra.mxu0 %v276
        %1009 = vmatpush.msra.mxu0 %v260
        %1010 = vmatpush.msra.mxu0 %v244
        %1011 = vmatpush.msra.mxu0 %v228
        %1012 = vmatpush.msra.mxu0 %v212
        %1013 = vmatmul.f32.gmra.mxu0 %v203
        %v1014 = vpop.f32.mrf.mxu0
        %v1015 = vadd.f32 0.0, %v1014
        %1016 = vdwg.mxu0
        %1017 = vmatpush.msra.mxu0 %v708
        %1018 = vmatpush.msra.mxu0 %v692
        %1019 = vmatpush.msra.mxu0 %v676
        %1020 = vmatpush.msra.mxu0 %v660
        %1021 = vmatpush.msra.mxu0 %v644
        %1022 = vmatpush.msra.mxu0 %v628
        %1023 = vmatpush.msra.mxu0 %v612
        %1024 = vmatpush.msra.mxu0 %v596
        %1025 = vmatpush.msra.mxu0 %v580
        %1026 = vmatpush.msra.mxu0 %v564
        %1027 = vmatpush.msra.mxu0 %v548
        %1028 = vmatpush.msra.mxu0 %v532
        %1029 = vmatpush.msra.mxu0 %v516
        %1030 = vmatpush.msra.mxu0 %v500
        %1031 = vmatpush.msra.mxu0 %v484
        %1032 = vmatpush.msra.mxu0 %v468
        %1033 = vmatmul.f32.gmra.mxu0 %v204
        %v1034 = vpop.f32.mrf.mxu0
        %v1035 = vadd.f32 %v1015, %v1034
        %1036 = vdwg.mxu0
        %1037 = vmatpush.msra.mxu0 %v453
        %1038 = vmatpush.msra.mxu0 %v437
        %1039 = vmatpush.msra.mxu0 %v421
        %1040 = vmatpush.msra.mxu0 %v405
        %1041 = vmatpush.msra.mxu0 %v389
        %1042 = vmatpush.msra.mxu0 %v373
        %1043 = vmatpush.msra.mxu0 %v357
        %1044 = vmatpush.msra.mxu0 %v341
        %1045 = vmatpush.msra.mxu0 %v325
        %1046 = vmatpush.msra.mxu0 %v309
        %1047 = vmatpush.msra.mxu0 %v293
        %1048 = vmatpush.msra.mxu0 %v277
        %1049 = vmatpush.msra.mxu0 %v261
        %1050 = vmatpush.msra.mxu0 %v245
        %1051 = vmatpush.msra.mxu0 %v229
        %1052 = vmatpush.msra.mxu0 %v213
        %1053 = vmatmul.f32.gmra.mxu0 %v203
        %v1054 = vpop.f32.mrf.mxu0
        %v1055 = vadd.f32 0.0, %v1054
        %1056 = vdwg.mxu0
        %1057 = vmatpush.msra.mxu0 %v709
        %1058 = vmatpush.msra.mxu0 %v693
        %1059 = vmatpush.msra.mxu0 %v677
        %1060 = vmatpush.msra.mxu0 %v661
        %1061 = vmatpush.msra.mxu0 %v645
        %1062 = vmatpush.msra.mxu0 %v629
        %1063 = vmatpush.msra.mxu0 %v613
        %1064 = vmatpush.msra.mxu0 %v597
        %1065 = vmatpush.msra.mxu0 %v581
        %1066 = vmatpush.msra.mxu0 %v565
        %1067 = vmatpush.msra.mxu0 %v549
        %1068 = vmatpush.msra.mxu0 %v533
        %1069 = vmatpush.msra.mxu0 %v517
        %1070 = vmatpush.msra.mxu0 %v501
        %1071 = vmatpush.msra.mxu0 %v485
        %1072 = vmatpush.msra.mxu0 %v469
        %1073 = vmatmul.f32.gmra.mxu0 %v204
        %v1074 = vpop.f32.mrf.mxu0
        %v1075 = vadd.f32 %v1055, %v1074
        %1076 = vdwg.mxu0
        %1077 = vmatpush.msra.mxu0 %v454
        %1078 = vmatpush.msra.mxu0 %v438
        %1079 = vmatpush.msra.mxu0 %v422
        %1080 = vmatpush.msra.mxu0 %v406
        %1081 = vmatpush.msra.mxu0 %v390
        %1082 = vmatpush.msra.mxu0 %v374
        %1083 = vmatpush.msra.mxu0 %v358
        %1084 = vmatpush.msra.mxu0 %v342
        %1085 = vmatpush.msra.mxu0 %v326
        %1086 = vmatpush.msra.mxu0 %v310
        %1087 = vmatpush.msra.mxu0 %v294
        %1088 = vmatpush.msra.mxu0 %v278
        %1089 = vmatpush.msra.mxu0 %v262
        %1090 = vmatpush.msra.mxu0 %v246
        %1091 = vmatpush.msra.mxu0 %v230
        %1092 = vmatpush.msra.mxu0 %v214
        %1093 = vmatmul.f32.gmra.mxu0 %v203
        %v1094 = vpop.f32.mrf.mxu0
        %v1095 = vadd.f32 0.0, %v1094
        %1096 = vdwg.mxu0
        %1097 = vmatpush.msra.mxu0 %v710
        %1098 = vmatpush.msra.mxu0 %v694
        %1099 = vmatpush.msra.mxu0 %v678
        %1100 = vmatpush.msra.mxu0 %v662
        %1101 = vmatpush.msra.mxu0 %v646
        %1102 = vmatpush.msra.mxu0 %v630
        %1103 = vmatpush.msra.mxu0 %v614
        %1104 = vmatpush.msra.mxu0 %v598
        %1105 = vmatpush.msra.mxu0 %v582
        %1106 = vmatpush.msra.mxu0 %v566
        %1107 = vmatpush.msra.mxu0 %v550
        %1108 = vmatpush.msra.mxu0 %v534
        %1109 = vmatpush.msra.mxu0 %v518
        %1110 = vmatpush.msra.mxu0 %v502
        %1111 = vmatpush.msra.mxu0 %v486
        %1112 = vmatpush.msra.mxu0 %v470
        %1113 = vmatmul.f32.gmra.mxu0 %v204
        %v1114 = vpop.f32.mrf.mxu0
        %v1115 = vadd.f32 %v1095, %v1114
        %1116 = vdwg.mxu0
        %1117 = vmatpush.msra.mxu0 %v455
        %1118 = vmatpush.msra.mxu0 %v439
        %1119 = vmatpush.msra.mxu0 %v423
        %1120 = vmatpush.msra.mxu0 %v407
        %1121 = vmatpush.msra.mxu0 %v391
        %1122 = vmatpush.msra.mxu0 %v375
        %1123 = vmatpush.msra.mxu0 %v359
        %1124 = vmatpush.msra.mxu0 %v343
        %1125 = vmatpush.msra.mxu0 %v327
        %1126 = vmatpush.msra.mxu0 %v311
        %1127 = vmatpush.msra.mxu0 %v295
        %1128 = vmatpush.msra.mxu0 %v279
        %1129 = vmatpush.msra.mxu0 %v263
        %1130 = vmatpush.msra.mxu0 %v247
        %1131 = vmatpush.msra.mxu0 %v231
        %1132 = vmatpush.msra.mxu0 %v215
        %1133 = vmatmul.f32.gmra.mxu0 %v203
        %v1134 = vpop.f32.mrf.mxu0
        %v1135 = vadd.f32 0.0, %v1134
        %1136 = vdwg.mxu0
        %1137 = vmatpush.msra.mxu0 %v711
        %1138 = vmatpush.msra.mxu0 %v695
        %1139 = vmatpush.msra.mxu0 %v679
        %1140 = vmatpush.msra.mxu0 %v663
        %1141 = vmatpush.msra.mxu0 %v647
        %1142 = vmatpush.msra.mxu0 %v631
        %1143 = vmatpush.msra.mxu0 %v615
        %1144 = vmatpush.msra.mxu0 %v599
        %1145 = vmatpush.msra.mxu0 %v583
        %1146 = vmatpush.msra.mxu0 %v567
        %1147 = vmatpush.msra.mxu0 %v551
        %1148 = vmatpush.msra.mxu0 %v535
        %1149 = vmatpush.msra.mxu0 %v519
        %1150 = vmatpush.msra.mxu0 %v503
        %1151 = vmatpush.msra.mxu0 %v487
        %1152 = vmatpush.msra.mxu0 %v471
        %1153 = vmatmul.f32.gmra.mxu0 %v204
        %v1154 = vpop.f32.mrf.mxu0
        %v1155 = vadd.f32 %v1135, %v1154
        %1156 = vdwg.mxu0
        %1157 = vmatpush.msra.mxu0 %v456
        %1158 = vmatpush.msra.mxu0 %v440
        %1159 = vmatpush.msra.mxu0 %v424
        %1160 = vmatpush.msra.mxu0 %v408
        %1161 = vmatpush.msra.mxu0 %v392
        %1162 = vmatpush.msra.mxu0 %v376
        %1163 = vmatpush.msra.mxu0 %v360
        %1164 = vmatpush.msra.mxu0 %v344
        %1165 = vmatpush.msra.mxu0 %v328
        %1166 = vmatpush.msra.mxu0 %v312
        %1167 = vmatpush.msra.mxu0 %v296
        %1168 = vmatpush.msra.mxu0 %v280
        %1169 = vmatpush.msra.mxu0 %v264
        %1170 = vmatpush.msra.mxu0 %v248
        %1171 = vmatpush.msra.mxu0 %v232
        %1172 = vmatpush.msra.mxu0 %v216
        %1173 = vmatmul.f32.gmra.mxu0 %v203
        %v1174 = vpop.f32.mrf.mxu0
        %v1175 = vadd.f32 0.0, %v1174
        %1176 = vdwg.mxu0
        %1177 = vmatpush.msra.mxu0 %v712
        %1178 = vmatpush.msra.mxu0 %v696
        %1179 = vmatpush.msra.mxu0 %v680
        %1180 = vmatpush.msra.mxu0 %v664
        %1181 = vmatpush.msra.mxu0 %v648
        %1182 = vmatpush.msra.mxu0 %v632
        %1183 = vmatpush.msra.mxu0 %v616
        %1184 = vmatpush.msra.mxu0 %v600
        %1185 = vmatpush.msra.mxu0 %v584
        %1186 = vmatpush.msra.mxu0 %v568
        %1187 = vmatpush.msra.mxu0 %v552
        %1188 = vmatpush.msra.mxu0 %v536
        %1189 = vmatpush.msra.mxu0 %v520
        %1190 = vmatpush.msra.mxu0 %v504
        %1191 = vmatpush.msra.mxu0 %v488
        %1192 = vmatpush.msra.mxu0 %v472
        %1193 = vmatmul.f32.gmra.mxu0 %v204
        %v1194 = vpop.f32.mrf.mxu0
        %v1195 = vadd.f32 %v1175, %v1194
        %1196 = vdwg.mxu0
        %1197 = vmatpush.msra.mxu0 %v457
        %1198 = vmatpush.msra.mxu0 %v441
        %1199 = vmatpush.msra.mxu0 %v425
        %1200 = vmatpush.msra.mxu0 %v409
        %1201 = vmatpush.msra.mxu0 %v393
        %1202 = vmatpush.msra.mxu0 %v377
        %1203 = vmatpush.msra.mxu0 %v361
        %1204 = vmatpush.msra.mxu0 %v345
        %1205 = vmatpush.msra.mxu0 %v329
        %1206 = vmatpush.msra.mxu0 %v313
        %1207 = vmatpush.msra.mxu0 %v297
        %1208 = vmatpush.msra.mxu0 %v281
        %1209 = vmatpush.msra.mxu0 %v265
        %1210 = vmatpush.msra.mxu0 %v249
        %1211 = vmatpush.msra.mxu0 %v233
        %1212 = vmatpush.msra.mxu0 %v217
        %1213 = vmatmul.f32.gmra.mxu0 %v203
        %v1214 = vpop.f32.mrf.mxu0
        %v1215 = vadd.f32 0.0, %v1214
        %1216 = vdwg.mxu0
        %1217 = vmatpush.msra.mxu0 %v713
        %1218 = vmatpush.msra.mxu0 %v697
        %1219 = vmatpush.msra.mxu0 %v681
        %1220 = vmatpush.msra.mxu0 %v665
        %1221 = vmatpush.msra.mxu0 %v649
        %1222 = vmatpush.msra.mxu0 %v633
        %1223 = vmatpush.msra.mxu0 %v617
        %1224 = vmatpush.msra.mxu0 %v601
        %1225 = vmatpush.msra.mxu0 %v585
        %1226 = vmatpush.msra.mxu0 %v569
        %1227 = vmatpush.msra.mxu0 %v553
        %1228 = vmatpush.msra.mxu0 %v537
        %1229 = vmatpush.msra.mxu0 %v521
        %1230 = vmatpush.msra.mxu0 %v505
        %1231 = vmatpush.msra.mxu0 %v489
        %1232 = vmatpush.msra.mxu0 %v473
        %1233 = vmatmul.f32.gmra.mxu0 %v204
        %v1234 = vpop.f32.mrf.mxu0
        %v1235 = vadd.f32 %v1215, %v1234
        %1236 = vdwg.mxu0
        %1237 = vmatpush.msra.mxu0 %v458
        %1238 = vmatpush.msra.mxu0 %v442
        %1239 = vmatpush.msra.mxu0 %v426
        %1240 = vmatpush.msra.mxu0 %v410
        %1241 = vmatpush.msra.mxu0 %v394
        %1242 = vmatpush.msra.mxu0 %v378
        %1243 = vmatpush.msra.mxu0 %v362
        %1244 = vmatpush.msra.mxu0 %v346
        %1245 = vmatpush.msra.mxu0 %v330
        %1246 = vmatpush.msra.mxu0 %v314
        %1247 = vmatpush.msra.mxu0 %v298
        %1248 = vmatpush.msra.mxu0 %v282
        %1249 = vmatpush.msra.mxu0 %v266
        %1250 = vmatpush.msra.mxu0 %v250
        %1251 = vmatpush.msra.mxu0 %v234
        %1252 = vmatpush.msra.mxu0 %v218
        %1253 = vmatmul.f32.gmra.mxu0 %v203
        %v1254 = vpop.f32.mrf.mxu0
        %v1255 = vadd.f32 0.0, %v1254
        %1256 = vdwg.mxu0
        %1257 = vmatpush.msra.mxu0 %v714
        %1258 = vmatpush.msra.mxu0 %v698
        %1259 = vmatpush.msra.mxu0 %v682
        %1260 = vmatpush.msra.mxu0 %v666
        %1261 = vmatpush.msra.mxu0 %v650
        %1262 = vmatpush.msra.mxu0 %v634
        %1263 = vmatpush.msra.mxu0 %v618
        %1264 = vmatpush.msra.mxu0 %v602
        %1265 = vmatpush.msra.mxu0 %v586
        %1266 = vmatpush.msra.mxu0 %v570
        %1267 = vmatpush.msra.mxu0 %v554
        %1268 = vmatpush.msra.mxu0 %v538
        %1269 = vmatpush.msra.mxu0 %v522
        %1270 = vmatpush.msra.mxu0 %v506
        %1271 = vmatpush.msra.mxu0 %v490
        %1272 = vmatpush.msra.mxu0 %v474
        %1273 = vmatmul.f32.gmra.mxu0 %v204
        %v1274 = vpop.f32.mrf.mxu0
        %v1275 = vadd.f32 %v1255, %v1274
        %1276 = vdwg.mxu0
        %1277 = vmatpush.msra.mxu0 %v459
        %1278 = vmatpush.msra.mxu0 %v443
        %1279 = vmatpush.msra.mxu0 %v427
        %1280 = vmatpush.msra.mxu0 %v411
        %1281 = vmatpush.msra.mxu0 %v395
        %1282 = vmatpush.msra.mxu0 %v379
        %1283 = vmatpush.msra.mxu0 %v363
        %1284 = vmatpush.msra.mxu0 %v347
        %1285 = vmatpush.msra.mxu0 %v331
        %1286 = vmatpush.msra.mxu0 %v315
        %1287 = vmatpush.msra.mxu0 %v299
        %1288 = vmatpush.msra.mxu0 %v283
        %1289 = vmatpush.msra.mxu0 %v267
        %1290 = vmatpush.msra.mxu0 %v251
        %1291 = vmatpush.msra.mxu0 %v235
        %1292 = vmatpush.msra.mxu0 %v219
        %1293 = vmatmul.f32.gmra.mxu0 %v203
        %v1294 = vpop.f32.mrf.mxu0
        %v1295 = vadd.f32 0.0, %v1294
        %1296 = vdwg.mxu0
        %1297 = vmatpush.msra.mxu0 %v715
        %1298 = vmatpush.msra.mxu0 %v699
        %1299 = vmatpush.msra.mxu0 %v683
        %1300 = vmatpush.msra.mxu0 %v667
        %1301 = vmatpush.msra.mxu0 %v651
        %1302 = vmatpush.msra.mxu0 %v635
        %1303 = vmatpush.msra.mxu0 %v619
        %1304 = vmatpush.msra.mxu0 %v603
        %1305 = vmatpush.msra.mxu0 %v587
        %1306 = vmatpush.msra.mxu0 %v571
        %1307 = vmatpush.msra.mxu0 %v555
        %1308 = vmatpush.msra.mxu0 %v539
        %1309 = vmatpush.msra.mxu0 %v523
        %1310 = vmatpush.msra.mxu0 %v507
        %1311 = vmatpush.msra.mxu0 %v491
        %1312 = vmatpush.msra.mxu0 %v475
        %1313 = vmatmul.f32.gmra.mxu0 %v204
        %v1314 = vpop.f32.mrf.mxu0
        %v1315 = vadd.f32 %v1295, %v1314
        %1316 = vdwg.mxu0
        %1317 = vmatpush.msra.mxu0 %v460
        %1318 = vmatpush.msra.mxu0 %v444
        %1319 = vmatpush.msra.mxu0 %v428
        %1320 = vmatpush.msra.mxu0 %v412
        %1321 = vmatpush.msra.mxu0 %v396
        %1322 = vmatpush.msra.mxu0 %v380
        %1323 = vmatpush.msra.mxu0 %v364
        %1324 = vmatpush.msra.mxu0 %v348
        %1325 = vmatpush.msra.mxu0 %v332
        %1326 = vmatpush.msra.mxu0 %v316
        %1327 = vmatpush.msra.mxu0 %v300
        %1328 = vmatpush.msra.mxu0 %v284
        %1329 = vmatpush.msra.mxu0 %v268
        %1330 = vmatpush.msra.mxu0 %v252
        %1331 = vmatpush.msra.mxu0 %v236
        %1332 = vmatpush.msra.mxu0 %v220
        %1333 = vmatmul.f32.gmra.mxu0 %v203
        %v1334 = vpop.f32.mrf.mxu0
        %v1335 = vadd.f32 0.0, %v1334
        %1336 = vdwg.mxu0
        %1337 = vmatpush.msra.mxu0 %v716
        %1338 = vmatpush.msra.mxu0 %v700
        %1339 = vmatpush.msra.mxu0 %v684
        %1340 = vmatpush.msra.mxu0 %v668
        %1341 = vmatpush.msra.mxu0 %v652
        %1342 = vmatpush.msra.mxu0 %v636
        %1343 = vmatpush.msra.mxu0 %v620
        %1344 = vmatpush.msra.mxu0 %v604
        %1345 = vmatpush.msra.mxu0 %v588
        %1346 = vmatpush.msra.mxu0 %v572
        %1347 = vmatpush.msra.mxu0 %v556
        %1348 = vmatpush.msra.mxu0 %v540
        %1349 = vmatpush.msra.mxu0 %v524
        %1350 = vmatpush.msra.mxu0 %v508
        %1351 = vmatpush.msra.mxu0 %v492
        %1352 = vmatpush.msra.mxu0 %v476
        %1353 = vmatmul.f32.gmra.mxu0 %v204
        %v1354 = vpop.f32.mrf.mxu0
        %v1355 = vadd.f32 %v1335, %v1354
        %1356 = vdwg.mxu0
        %1357 = vst [vmem:[%s200] sm:$0xff] %v755
        %1358 = vst [vmem:[%s200 + $0x8] sm:$0xff] %v795
        %1359 = vst [vmem:[%s200 + $0x10] sm:$0xff] %v835
        %1360 = vst [vmem:[%s200 + $0x18] sm:$0xff] %v875
        %1361 = vst [vmem:[%s200 + $0x20] sm:$0xff] %v915
        %1362 = vst [vmem:[%s200 + $0x28] sm:$0xff] %v955
        %1363 = vst [vmem:[%s200 + $0x30] sm:$0xff] %v995
        %1364 = vst [vmem:[%s200 + $0x38] sm:$0xff] %v1035
        %1365 = vst [vmem:[%s200 + $0x40] sm:$0xff] %v1075
        %1366 = vst [vmem:[%s200 + $0x48] sm:$0xff] %v1115
        %1367 = vst [vmem:[%s200 + $0x50] sm:$0xff] %v1155
        %1368 = vst [vmem:[%s200 + $0x58] sm:$0xff] %v1195
        %1369 = vst [vmem:[%s200 + $0x60] sm:$0xff] %v1235
        %1370 = vst [vmem:[%s200 + $0x68] sm:$0xff] %v1275
        %1371 = vst [vmem:[%s200 + $0x70] sm:$0xff] %v1315
        %1372 = vst [vmem:[%s200 + $0x78] sm:$0xff] %v1355
        %s1373 = sand.u32 %s94, 1
        %s1374 = scalar_lea.sflag [#allocation4], %s1373
        %s1375 = sand.u32 %s94, 1
        %s1376 = smul.addr %s1375, 128
        %s1377 = scalar_lea.vmem [#allocation7], %s1376
        // Predicated region
        $region37: #{tpu_custom_call.1} parent=27 // pred_check
          %p1378 = pneg %p104
        $region38: #{tpu_custom_call.1} parent=27 // pred_check_branch
          %1380 = sbr.rel (%p1378) target = $region40
        $region39: #{tpu_custom_call.1} parent=27 // pred_region
          %s1381 = smul.u32 16, %s24
          %1383 = vsyncadd %s1374, 0
          %s1384 = smul.addr %s25, 32
          %s1385 = sadd.s32 %s1381, %s1384
          %s1386 = smul.addr %s1385, 8
          %s1387 = scalar_lea.hbm %s2, %s1386
          %s1389 = sshll.u32 %s1377, 4
          %s1390 = int_to_ptr.vmem [resolvable:$true] %s1389
          %s1391 = sshll.u32 %s1387, 4
          %s1392 = int_to_ptr.hbm [resolvable:$true] %s1391
          %1394 = dma.vmem_to_hbm [thread:$0]  %s1390, 2048, %s1392, %s1374
        $region40: #{tpu_custom_call.1} parent=27 // pred_fallthru
          _
      $region28: #{tpu_custom_call.1} parent=5 // pred_fallthru
        _
      %p1395 = scmp.le.s32.totalorder 2, %s15
      // Predicated region
      $region41: #{tpu_custom_call.1} parent=5 // pred_check
        %p1396 = pneg %p1395
      $region42: #{tpu_custom_call.1} parent=5 // pred_check_branch
        %1398 = sbr.rel (%p1396) target = $region44
      $region43: #{tpu_custom_call.1} parent=5 // pred_region
        %s1399 = ssub.s32 %s15, 2
        // Predicated region
        $region45: #{tpu_custom_call.1} parent=43 // pred_check
          %p1400 = pneg %p110
        $region46: #{tpu_custom_call.1} parent=43 // pred_check_branch
          %1402 = sbr.rel (%p1400) target = $region48
        $region47: #{tpu_custom_call.1} parent=43 // pred_region
          %s1403 = sand.u32 %s95, 1
          %s1404 = scalar_lea.sflag [#allocation4], %s1403
          %s1405 = sand.u32 %s95, 1
          %s1406 = smul.addr %s1405, 128
          %s1407 = scalar_lea.vmem [#allocation7], %s1406
          %1409 = dma.done %s1404, 2048
        $region48: #{tpu_custom_call.1} parent=43 // pred_fallthru
          _
      $region44: #{tpu_custom_call.1} parent=5 // pred_fallthru
        _
    $region6: #{tpu_custom_call.1} parent=1 // loop_footer
      %s19 = sadd.s32 1, %s15
    $region7: #{tpu_custom_call.1} parent=1 // loop_footer_branch
      %14 = sbr.rel target = $region3
    $region8: #{tpu_custom_call.1} parent=1 // loop_exit
      _
    %1410 = vsyncpa [#allocation3], 1
    %s1411 = scalar_lea.sflag [#allocation3], 1
    %1412 = vsyncpa %s1411, 1
    %1413 = vsyncpa [#allocation6], 1
    %s1414 = scalar_lea.sflag [#allocation6], 1
    %1415 = vsyncpa %s1414, 1
    %1416 = vsyncpa [#allocation4], 1
    %s1417 = scalar_lea.sflag [#allocation4], 1
    %1418 = vsyncpa %s1417, 1

</llo_original>
